<compile_context>
chip_gen: v6e
topology: v6e:2x2x1
jax: 0.10.0
libtpu: 0.0.40
codegen_flags: <defaults>
</compile_context>

<pallas_src>
import math

import jax
import jax.numpy as jnp
from jax import lax
from jax.experimental import pallas as pl
from jax.experimental.pallas import tpu as pltpu


# ------------------------ resize helpers (shared with reference) -------------

def _bilinear_upsample_x2(x_nchw):
    """nn.Upsample(scale_factor=2, mode='bilinear', align_corners=True), f32."""
    n, c, h, w = x_nchw.shape
    ho, wo = 2 * h, 2 * w

    def src(n_in, n_out):
        if n_out == 1:
            s = jnp.zeros((1,), jnp.float32)
        else:
            s = jnp.arange(n_out, dtype=jnp.float32) * ((n_in - 1) / (n_out - 1))
        i0 = jnp.clip(jnp.floor(s).astype(jnp.int32), 0, n_in - 1)
        i1 = jnp.clip(i0 + 1, 0, n_in - 1)
        return i0, i1, s - i0.astype(jnp.float32)

    h0, h1, fh = src(h, ho)
    w0, w1, fw = src(w, wo)
    xh = (x_nchw[:, :, h0, :] * (1.0 - fh)[None, None, :, None]
          + x_nchw[:, :, h1, :] * fh[None, None, :, None])
    return (xh[:, :, :, w0] * (1.0 - fw)[None, None, None, :]
            + xh[:, :, :, w1] * fw[None, None, None, :])


def _nearest_resize(x_nchw, ho, wo):
    """F.interpolate(mode='nearest') as a pure gather (no one-hot matmuls)."""
    _, _, h, w = x_nchw.shape
    hi = jnp.clip(jnp.floor(jnp.arange(ho) * (h / ho)).astype(jnp.int32), 0, h - 1)
    wi = jnp.clip(jnp.floor(jnp.arange(wo) * (w / wo)).astype(jnp.int32), 0, w - 1)
    return x_nchw[:, :, hi, :][:, :, :, wi]


def _choose_hw_tile(hw, wo, n_batch, target=1024, cap=4096):
    """Lane tile: multiple of lcm(wo, 128) (tiles start on row boundaries, stores
    are lane-dense), divides hw, grown toward `target` lanes but shrunk again if
    that would leave fewer than ~4 grid steps (keeps both v7x TensorCores fed and
    gives the manual halo DMA something to overlap with)."""
    q = (wo * 128) // math.gcd(wo, 128)
    if hw % q != 0:
        # Odd image size: whole image per step (masked partial stores; correct).
        return hw
    tm = q
    while tm < target and tm * 2 <= min(hw, cap) and hw % (tm * 2) == 0:
        tm *= 2
    while n_batch * (hw // tm) < 4 and tm > q and (tm // 2) % q == 0:
        tm //= 2
    return tm


# ----------------------------- Pallas kernel ---------------------------------

def _make_decoder_kernel(*, dim, cin, sdim, cout, wo, tm, tw_pad, nt, residual):
    def kernel(*refs):
        if residual:
            (xf_hbm, sk_ref, mask_ref, w1_ref, b1_ref, w2_ref, b2_ref,
             o_ref, xwin, sem, tap_sc, hs_sc) = refs
        else:
            (xf_hbm, mask_ref, w1_ref, b1_ref, w2_ref, b2_ref,
             o_ref, xwin, sem, tap_sc) = refs

        b = pl.program_id(0)
        t = pl.program_id(1)

        def halo_copy(tile, slot):
            # Overlapping (cin, tw_pad) window of the padded flat bf16 image.
            return pltpu.make_async_copy(
                xf_hbm.at[b, :, pl.ds(tile * tm, tw_pad)],
                xwin.at[slot], sem.at[slot])

        @pl.when(t == 0)                      # prime the pipe for this batch
        def _():
            halo_copy(0, 0).start()

        slot = t % 2
        halo_copy(t, slot).wait()

        @pl.when(t + 1 < nt)                  # prefetch next tile while computing
        def _():
            halo_copy(t + 1, 1 - slot).start()

        xw = xwin[slot]                       # (cin, tw_pad) bf16 halo window
        mask_w = mask_ref[0:1, :]             # (1, tm), 0 where col == 0
        mask_e = mask_ref[1:2, :]             # (1, tm), 0 where col == wo-1

        # 3x3 conv (BN1 scale pre-folded): stack the 9 statically shifted taps
        # into one (9*cin, tm) matrix and run a single K=9*cin MXU dot instead
        # of nine K=cin dots.
        for ky in range(3):
            for kx in range(3):
                off = ky * wo + kx
                tap = xw[:, off:off + tm]     # (cin, tm)
                if kx == 0:
                    tap = tap * mask_w        # west neighbour of column 0 -> 0
                elif kx == 2:
                    tap = tap * mask_e        # east neighbour of column wo-1 -> 0
                k = ky * 3 + kx
                tap_sc[k * cin:(k + 1) * cin, :] = tap

        acc = jnp.dot(w1_ref[...], tap_sc[...],
                      preferred_element_type=jnp.float32)          # (dim, tm)
        h = jnp.maximum(acc + b1_ref[...], 0.0).astype(jnp.bfloat16)

        if residual:
            # Fuse the 1x1 conv (BN2 folded) and the skip 1x1 conv into a single
            # K = dim + sdim dot with one merged bias.
            hs_sc[0:dim, :] = h
            hs_sc[dim:dim + sdim, :] = sk_ref[...]
            z = jnp.dot(w2_ref[...], hs_sc[...],
                        preferred_element_type=jnp.float32)
        else:
            z = jnp.dot(w2_ref[...], h, preferred_element_type=jnp.float32)
        o_ref[...] = jnp.maximum(z + b2_ref[...], 0.0).astype(o_ref.dtype)

    return kernel


# ----------------------------- forward wrapper -------------------------------

def decoder_block_forward(x_nchw, skip_nchw, params, *, residual=True,
                          out_dtype=jnp.bfloat16):
    """DecoderBlock forward (eval-mode BN). NCHW in / NCHW out (out_dtype)."""
    x = x_nchw.astype(jnp.float32)
    n, cin, h, w = x.shape
    ho, wo = 2 * h, 2 * w
    hw = ho * wo
    eps = params["eps"]

    # Bilinear x2 upsample (align_corners=True) as a cheap gather-lerp in f32.
    x_up = _bilinear_upsample_x2(x)                       # (n, cin, ho, wo)

    tm = _choose_hw_tile(hw, wo, n)
    nt = hw // tm
    halo_pad = -(-(2 * wo + 2) // 128) * 128              # halo rounded to 128 lanes
    tw_pad = tm + halo_pad                                # per-tile DMA window width
    # Padded flat image: wo+1 leading zeros (3x3 'same' padding in flat coords)
    # and enough trailing zeros that every tile's window stays in bounds.
    xf = jnp.pad(x_up.reshape(n, cin, hw).astype(jnp.bfloat16),
                 ((0, 0), (0, 0), (wo + 1, halo_pad - (wo + 1))))

    # Column-edge masks (shared by all tiles since tm is a multiple of wo).
    col = jnp.arange(tm, dtype=jnp.int32) % wo
    masks = jnp.stack([(col >= 1), (col <= wo - 2)]).astype(jnp.bfloat16)  # (2, tm)

    # Fold eval-mode BatchNorm into the conv weights / biases.
    w1 = params["conv1_w"]                                 # (dim, cin, 3, 3)
    dim = w1.shape[0]
    s1 = params["bn1_gamma"] / jnp.sqrt(params["bn1_var"] + eps)
    b1 = (params["bn1_beta"] - params["bn1_mean"] * s1).reshape(dim, 1)
    w1f = jnp.transpose(w1 * s1[:, None, None, None], (0, 2, 3, 1))
    w1f = w1f.reshape(dim, 9 * cin).astype(jnp.bfloat16)   # (ky, kx, cin)-major cols

    w2 = params["conv2_w"][:, :, 0, 0]                     # (cout, dim)
    cout = w2.shape[0]
    s2 = params["bn2_gamma"] / jnp.sqrt(params["bn2_var"] + eps)
    b2 = params["bn2_beta"] - params["bn2_mean"] * s2
    w2f = w2 * s2[:, None]

    sdim = 0
    if residual:
        skip = skip_nchw.astype(jnp.float32)
        sdim = skip.shape[1]
        # Nearest resize commutes with a 1x1 conv + per-channel bias, so resize
        # the raw skip here (gather) and fold its 1x1 conv into the kernel dot.
        skip_flat = _nearest_resize(skip, ho, wo).reshape(n, sdim, hw)
        skip_flat = skip_flat.astype(jnp.bfloat16)
        w3 = params["up_w"][:, :, 0, 0]                    # (cout, sdim)
        w2f = jnp.concatenate([w2f, w3], axis=1)           # (cout, dim+sdim)
        b2 = b2 + params["up_b"]
    w2f = w2f.astype(jnp.bfloat16)
    b2 = b2.reshape(cout, 1)

    kernel = _make_decoder_kernel(dim=dim, cin=cin, sdim=sdim, cout=cout, wo=wo,
                                  tm=tm, tw_pad=tw_pad, nt=nt, residual=residual)

    # Specs: the halo source stays in HBM (manual double-buffered DMA in-kernel);
    # everything else is small / lane-dense and auto-pipelined by BlockSpec.
    xf_spec = pl.BlockSpec(memory_space=pl.ANY)
    mask_spec = pl.BlockSpec((2, tm), lambda b, t: (0, 0))
    w1_spec = pl.BlockSpec((dim, 9 * cin), lambda b, t: (0, 0))
    b1_spec = pl.BlockSpec((dim, 1), lambda b, t: (0, 0))
    w2_spec = pl.BlockSpec(w2f.shape, lambda b, t: (0, 0))
    b2_spec = pl.BlockSpec((cout, 1), lambda b, t: (0, 0))
    out_spec = pl.BlockSpec((None, cout, tm), lambda b, t: (b, 0, t))
    out_shape = jax.ShapeDtypeStruct((n, cout, hw), out_dtype)

    in_specs = [xf_spec, mask_spec, w1_spec, b1_spec, w2_spec, b2_spec]
    operands = [xf, masks, w1f, b1, w2f, b2]
    scratch = [pltpu.VMEM((2, cin, tw_pad), jnp.bfloat16),   # halo double buffer
               pltpu.SemaphoreType.DMA((2,)),
               pltpu.VMEM((9 * cin, tm), jnp.bfloat16)]      # stacked 3x3 taps
    if residual:
        skip_spec = pl.BlockSpec((None, sdim, tm), lambda b, t: (b, 0, t))
        in_specs.insert(1, skip_spec)
        operands.insert(1, skip_flat)
        scratch.append(pltpu.VMEM((dim + sdim, tm), jnp.bfloat16))

    # VMEM limit from the actual block footprint (+ generous headroom), well
    # under v7x's 64 MiB per-TensorCore VMEM.
    out_bytes = jnp.asarray(0, out_dtype).dtype.itemsize
    blk = (2 * cin * tw_pad + 9 * cin * tm) * 2 + 2 * cout * tm * out_bytes
    if residual:
        blk += (2 * sdim * tm + (dim + sdim) * tm) * 2
    vmem_limit = int(min(max(4 * blk + (8 << 20), 16 << 20), 56 << 20))

    cparams = pltpu.CompilerParams(
        # Batch axis is megacore-parallel; the HW-tile axis is sequential because
        # it carries the manual double-buffer / prefetch state.
        dimension_semantics=("parallel", "arbitrary"),
        vmem_limit_bytes=vmem_limit)

    out_flat = pl.pallas_call(
        kernel,
        out_shape=out_shape,
        grid=(n, nt),
        in_specs=in_specs,
        out_specs=out_spec,
        scratch_shapes=scratch,
        compiler_params=cparams,
    )(*operands)

    return out_flat.reshape(n, cout, ho, wo)


# ----------------------------- pure-JAX reference ----------------------------

def decoder_block_reference(x_nchw, skip_nchw, params, *, residual=True):
    prec = lax.Precision.HIGHEST
    eps = params["eps"]
    x_up = _bilinear_upsample_x2(x_nchw.astype(jnp.float32))
    h = lax.conv_general_dilated(
        x_up, params["conv1_w"], (1, 1), "SAME",
        dimension_numbers=("NCHW", "OIHW", "NCHW"), precision=prec)
    h = ((h - params["bn1_mean"][None, :, None, None])
         / jnp.sqrt(params["bn1_var"] + eps)[None, :, None, None]
         * params["bn1_gamma"][None, :, None, None]
         + params["bn1_beta"][None, :, None, None])
    h = jnp.maximum(h, 0.0)
    z = jnp.einsum("ndhw,od->nohw", h, params["conv2_w"][:, :, 0, 0], precision=prec)
    z = ((z - params["bn2_mean"][None, :, None, None])
         / jnp.sqrt(params["bn2_var"] + eps)[None, :, None, None]
         * params["bn2_gamma"][None, :, None, None]
         + params["bn2_beta"][None, :, None, None])
    if residual:
        up = jnp.einsum("nkhw,ok->nohw", skip_nchw.astype(jnp.float32),
                        params["up_w"][:, :, 0, 0], precision=prec)
        up = up + params["up_b"][None, :, None, None]
        up = _nearest_resize(up, z.shape[2], z.shape[3])
        z = z + up
    return jnp.maximum(z, 0.0)


# ----------------------------- main -------------------------------------------

if __name__ == "__main__":
    in_channels, out_channels, skip_dim, factor = 4, 8, 6, 2
    residual = True
    dim = out_channels // factor
    eps = 1e-5

    key = jax.random.PRNGKey(0)
    ks = jax.random.split(key, 14)

    params = {
        "conv1_w": 0.2 * jax.random.normal(ks[0], (dim, in_channels, 3, 3), jnp.float32),
        "bn1_gamma": 1.0 + 0.1 * jax.random.normal(ks[1], (dim,), jnp.float32),
        "bn1_beta": 0.1 * jax.random.normal(ks[2], (dim,), jnp.float32),
        "bn1_mean": 0.05 * jax.random.normal(ks[3], (dim,), jnp.float32),
        "bn1_var": 1.0 + 0.1 * jax.random.uniform(ks[4], (dim,), jnp.float32),
        "conv2_w": 0.2 * jax.random.normal(ks[5], (out_channels, dim, 1, 1), jnp.float32),
        "bn2_gamma": 1.0 + 0.1 * jax.random.normal(ks[6], (out_channels,), jnp.float32),
        "bn2_beta": 0.1 * jax.random.normal(ks[7], (out_channels,), jnp.float32),
        "bn2_mean": 0.05 * jax.random.normal(ks[8], (out_channels,), jnp.float32),
        "bn2_var": 1.0 + 0.1 * jax.random.uniform(ks[9], (out_channels,), jnp.float32),
        "up_w": 0.2 * jax.random.normal(ks[10], (out_channels, skip_dim, 1, 1), jnp.float32),
        "up_b": 0.1 * jax.random.normal(ks[11], (out_channels,), jnp.float32),
        "eps": eps,
    }

    # Inputs (NCHW, PyTorch convention). Output spatial = 2x input spatial.
    x = jax.random.normal(ks[12], (2, in_channels, 16, 16), jnp.float32)
    skip = jax.random.normal(ks[13], (2, skip_dim, 15, 15), jnp.float32)

    out = decoder_block_forward(x, skip, params, residual=residual)
    out = jax.block_until_ready(out)

    ref = decoder_block_reference(x, skip, params, residual=residual)
    assert out.shape == (2, out_channels, 32, 32), out.shape
    out_f32 = out.astype(jnp.float32)
    max_err = float(jnp.max(jnp.abs(out_f32 - ref)))
    # Kernel runs bf16 inputs/outputs with f32 accumulation; reference is f32 HIGHEST.
    assert jnp.allclose(out_f32, ref, rtol=5e-2, atol=5e-2), max_err

    print("KERNEL_OK")
</pallas_src>

<mosaic_0001>
module attributes {stable_mosaic.version = 11 : i64} {
  func.func @kernel(%arg0: i32, %arg1: i32, %arg2: memref<2x4x1152xbf16, #tpu.memory_space<any>>, %arg3: memref<1x6x512xbf16, #tpu.memory_space<vmem>>, %arg4: memref<2x512xbf16, #tpu.memory_space<vmem>>, %arg5: memref<4x36xbf16, #tpu.memory_space<vmem>>, %arg6: memref<4x1xf32, #tpu.memory_space<vmem>>, %arg7: memref<8x10xbf16, #tpu.memory_space<vmem>>, %arg8: memref<8x1xf32, #tpu.memory_space<vmem>>, %arg9: memref<1x8x512xbf16, #tpu.memory_space<vmem>>, %arg10: memref<2x4x640xbf16, #tpu.memory_space<vmem>>, %arg11: memref<2x!tpu.dma_semaphore, #tpu.memory_space<semaphore_mem>>, %arg12: memref<36x512xbf16, #tpu.memory_space<vmem>>, %arg13: memref<10x512xbf16, #tpu.memory_space<vmem>>) attributes {dimension_semantics = [#tpu.dimension_semantics<parallel>, #tpu.dimension_semantics<arbitrary>], iteration_bounds = array<i64: 2, 2>, scalar_prefetch = 0 : i64, scratch_operands = 4 : i64, tpu.core_type = #tpu.core_type<tc>, window_params = [{}, {transform_indices = @transform_1, window_bounds = array<i64: 1, 6, 512>}, {pipeline_mode = #tpu.pipeline_mode<synchronous>, transform_indices = @transform_2, window_bounds = array<i64: 2, 512>}, {pipeline_mode = #tpu.pipeline_mode<synchronous>, transform_indices = @transform_3, window_bounds = array<i64: 4, 36>}, {pipeline_mode = #tpu.pipeline_mode<synchronous>, transform_indices = @transform_4, window_bounds = array<i64: 4, 1>}, {pipeline_mode = #tpu.pipeline_mode<synchronous>, transform_indices = @transform_5, window_bounds = array<i64: 8, 10>}, {pipeline_mode = #tpu.pipeline_mode<synchronous>, transform_indices = @transform_6, window_bounds = array<i64: 8, 1>}, {transform_indices = @transform_7, window_bounds = array<i64: 1, 8, 512>}]} {
    %c0_i32 = arith.constant 0 : i32
    %0 = arith.cmpi eq, %arg1, %c0_i32 : i32
    %1 = arith.extui %0 : i1 to i32
    %c0_i32_0 = arith.constant 0 : i32
    %2 = arith.cmpi ne, %1, %c0_i32_0 : i32
    scf.if %2 {
      %c0_i32_50 = arith.constant 0 : i32
      %c0_i32_51 = arith.constant 0 : i32
      %c0_i32_52 = arith.constant 0 : i32
      %c0_i32_53 = arith.constant 0 : i32
      %84 = tpu.memref_slice %arg2[%arg0, %c0_i32_52, %c0_i32_53] : memref<2x4x1152xbf16, #tpu.memory_space<any>> -> memref<1x4x640xbf16, #tpu.memory_space<any>>
      %85 = tpu.memref_squeeze %84 : memref<1x4x640xbf16, #tpu.memory_space<any>> -> memref<4x640xbf16, #tpu.memory_space<any>>
      %c0_i32_54 = arith.constant 0 : i32
      %c0_i32_55 = arith.constant 0 : i32
      %86 = tpu.memref_slice %arg10[%c0_i32_50, %c0_i32_54, %c0_i32_55] : memref<2x4x640xbf16, #tpu.memory_space<vmem>> -> memref<1x4x640xbf16, #tpu.memory_space<vmem>>
      %87 = tpu.memref_squeeze %86 : memref<1x4x640xbf16, #tpu.memory_space<vmem>> -> memref<4x640xbf16, #tpu.memory_space<vmem>>
      %88 = tpu.memref_slice %arg11[%c0_i32_51] : memref<2x!tpu.dma_semaphore, #tpu.memory_space<semaphore_mem>> -> memref<1x!tpu.dma_semaphore, #tpu.memory_space<semaphore_mem>>
      %89 = tpu.memref_squeeze %88 : memref<1x!tpu.dma_semaphore, #tpu.memory_space<semaphore_mem>> -> memref<!tpu.dma_semaphore, #tpu.memory_space<semaphore_mem>>
      tpu.enqueue_dma source(%85 : memref<4x640xbf16, #tpu.memory_space<any>>) target(%87 : memref<4x640xbf16, #tpu.memory_space<vmem>>) target_semaphore(%89 : memref<!tpu.dma_semaphore, #tpu.memory_space<semaphore_mem>>)
    } else {
    }
    %c2_i32 = arith.constant 2 : i32
    %c0_i32_1 = arith.constant 0 : i32
    %3 = arith.cmpi eq, %c2_i32, %c0_i32_1 : i32
    %c1_i32 = arith.constant 1 : i32
    %4 = arith.select %3, %c1_i32, %c2_i32 : i32
    %5 = arith.remsi %arg1, %4 : i32
    %c0_i32_2 = arith.constant 0 : i32
    %6 = arith.cmpi ne, %5, %c0_i32_2 : i32
    %c0_i32_3 = arith.constant 0 : i32
    %7 = arith.cmpi slt, %5, %c0_i32_3 : i32
    %c0_i32_4 = arith.constant 0 : i32
    %8 = arith.cmpi slt, %4, %c0_i32_4 : i32
    %9 = arith.xori %7, %8 : i1
    %10 = arith.andi %9, %6 : i1
    %11 = arith.addi %5, %4 : i32
    %12 = arith.select %10, %11, %5 : i32
    %c512_i32 = arith.constant 512 : i32
    %13 = arith.muli %arg1, %c512_i32 : i32
    %c0_i32_5 = arith.constant 0 : i32
    %14 = tpu.memref_slice %arg2[%arg0, %c0_i32_5, %13] : memref<2x4x1152xbf16, #tpu.memory_space<any>> -> memref<1x4x640xbf16, #tpu.memory_space<any>>
    %15 = tpu.memref_squeeze %14 : memref<1x4x640xbf16, #tpu.memory_space<any>> -> memref<4x640xbf16, #tpu.memory_space<any>>
    %c0_i32_6 = arith.constant 0 : i32
    %c0_i32_7 = arith.constant 0 : i32
    %16 = tpu.memref_slice %arg10[%12, %c0_i32_6, %c0_i32_7] : memref<2x4x640xbf16, #tpu.memory_space<vmem>> -> memref<1x4x640xbf16, #tpu.memory_space<vmem>>
    %17 = tpu.memref_squeeze %16 : memref<1x4x640xbf16, #tpu.memory_space<vmem>> -> memref<4x640xbf16, #tpu.memory_space<vmem>>
    %18 = tpu.memref_slice %arg11[%12] : memref<2x!tpu.dma_semaphore, #tpu.memory_space<semaphore_mem>> -> memref<1x!tpu.dma_semaphore, #tpu.memory_space<semaphore_mem>>
    %19 = tpu.memref_squeeze %18 : memref<1x!tpu.dma_semaphore, #tpu.memory_space<semaphore_mem>> -> memref<!tpu.dma_semaphore, #tpu.memory_space<semaphore_mem>>
    tpu.wait_dma2 semaphore(%19 : memref<!tpu.dma_semaphore, #tpu.memory_space<semaphore_mem>>) src(%15 : memref<4x640xbf16, #tpu.memory_space<any>>) dst(%17 : memref<4x640xbf16, #tpu.memory_space<vmem>>)
    %c1_i32_8 = arith.constant 1 : i32
    %20 = arith.addi %arg1, %c1_i32_8 : i32
    %c2_i32_9 = arith.constant 2 : i32
    %21 = arith.cmpi slt, %20, %c2_i32_9 : i32
    %22 = arith.extui %21 : i1 to i32
    %c0_i32_10 = arith.constant 0 : i32
    %23 = arith.cmpi ne, %22, %c0_i32_10 : i32
    scf.if %23 {
      %c1_i32_50 = arith.constant 1 : i32
      %84 = arith.addi %arg1, %c1_i32_50 : i32
      %c1_i32_51 = arith.constant 1 : i32
      %85 = arith.subi %c1_i32_51, %12 : i32
      %c512_i32_52 = arith.constant 512 : i32
      %86 = arith.muli %84, %c512_i32_52 : i32
      %c0_i32_53 = arith.constant 0 : i32
      %87 = tpu.memref_slice %arg2[%arg0, %c0_i32_53, %86] : memref<2x4x1152xbf16, #tpu.memory_space<any>> -> memref<1x4x640xbf16, #tpu.memory_space<any>>
      %88 = tpu.memref_squeeze %87 : memref<1x4x640xbf16, #tpu.memory_space<any>> -> memref<4x640xbf16, #tpu.memory_space<any>>
      %c0_i32_54 = arith.constant 0 : i32
      %c0_i32_55 = arith.constant 0 : i32
      %89 = tpu.memref_slice %arg10[%85, %c0_i32_54, %c0_i32_55] : memref<2x4x640xbf16, #tpu.memory_space<vmem>> -> memref<1x4x640xbf16, #tpu.memory_space<vmem>>
      %90 = tpu.memref_squeeze %89 : memref<1x4x640xbf16, #tpu.memory_space<vmem>> -> memref<4x640xbf16, #tpu.memory_space<vmem>>
      %91 = tpu.memref_slice %arg11[%85] : memref<2x!tpu.dma_semaphore, #tpu.memory_space<semaphore_mem>> -> memref<1x!tpu.dma_semaphore, #tpu.memory_space<semaphore_mem>>
      %92 = tpu.memref_squeeze %91 : memref<1x!tpu.dma_semaphore, #tpu.memory_space<semaphore_mem>> -> memref<!tpu.dma_semaphore, #tpu.memory_space<semaphore_mem>>
      tpu.enqueue_dma source(%88 : memref<4x640xbf16, #tpu.memory_space<any>>) target(%90 : memref<4x640xbf16, #tpu.memory_space<vmem>>) target_semaphore(%92 : memref<!tpu.dma_semaphore, #tpu.memory_space<semaphore_mem>>)
    } else {
    }
    %24 = arith.index_cast %12 : i32 to index
    %c0 = arith.constant 0 : index
    %c0_11 = arith.constant 0 : index
    %25 = vector.load %arg10[%24, %c0, %c0_11] : memref<2x4x640xbf16, #tpu.memory_space<vmem>>, vector<1x4x640xbf16>
    %26 = vector.shape_cast %25 : vector<1x4x640xbf16> to vector<4x640xbf16>
    %c0_12 = arith.constant 0 : index
    %c0_13 = arith.constant 0 : index
    %27 = vector.load %arg4[%c0_12, %c0_13] : memref<2x512xbf16, #tpu.memory_space<vmem>>, vector<1x512xbf16>
    %c1 = arith.constant 1 : index
    %c0_14 = arith.constant 0 : index
    %28 = vector.load %arg4[%c1, %c0_14] : memref<2x512xbf16, #tpu.memory_space<vmem>>, vector<1x512xbf16>
    %29 = vector.extract_strided_slice %26 {offsets = [0, 0], sizes = [4, 512], strides = [1, 1]} : vector<4x640xbf16> to vector<4x512xbf16>
    %30 = vector.broadcast %27 : vector<1x512xbf16> to vector<4x512xbf16>
    %31 = arith.mulf %29, %30 : vector<4x512xbf16>
    %c0_15 = arith.constant 0 : index
    %c0_16 = arith.constant 0 : index
    %32 = vector.load %arg12[%c0_15, %c0_16] : memref<36x512xbf16, #tpu.memory_space<vmem>>, vector<4x512xbf16>
    tpu.vector_store %arg12[%c0_15, %c0_16], %31 {strides = array<i32>} : memref<36x512xbf16, #tpu.memory_space<vmem>>, vector<4x512xbf16>,
    %33 = vector.extract_strided_slice %26 {offsets = [0, 1], sizes = [4, 512], strides = [1, 1]} : vector<4x640xbf16> to vector<4x512xbf16>
    %c4 = arith.constant 4 : index
    %c0_17 = arith.constant 0 : index
    %34 = vector.load %arg12[%c4, %c0_17] : memref<36x512xbf16, #tpu.memory_space<vmem>>, vector<4x512xbf16>
    tpu.vector_store %arg12[%c4, %c0_17], %33 {strides = array<i32>} : memref<36x512xbf16, #tpu.memory_space<vmem>>, vector<4x512xbf16>,
    %35 = vector.extract_strided_slice %26 {offsets = [0, 2], sizes = [4, 512], strides = [1, 1]} : vector<4x640xbf16> to vector<4x512xbf16>
    %36 = vector.broadcast %28 : vector<1x512xbf16> to vector<4x512xbf16>
    %37 = arith.mulf %35, %36 : vector<4x512xbf16>
    %c8 = arith.constant 8 : index
    %c0_18 = arith.constant 0 : index
    %38 = vector.load %arg12[%c8, %c0_18] : memref<36x512xbf16, #tpu.memory_space<vmem>>, vector<4x512xbf16>
    tpu.vector_store %arg12[%c8, %c0_18], %37 {strides = array<i32>} : memref<36x512xbf16, #tpu.memory_space<vmem>>, vector<4x512xbf16>,
    %39 = vector.extract_strided_slice %26 {offsets = [0, 32], sizes = [4, 512], strides = [1, 1]} : vector<4x640xbf16> to vector<4x512xbf16>
    %40 = vector.broadcast %27 : vector<1x512xbf16> to vector<4x512xbf16>
    %41 = arith.mulf %39, %40 : vector<4x512xbf16>
    %c12 = arith.constant 12 : index
    %c0_19 = arith.constant 0 : index
    %42 = vector.load %arg12[%c12, %c0_19] : memref<36x512xbf16, #tpu.memory_space<vmem>>, vector<4x512xbf16>
    tpu.vector_store %arg12[%c12, %c0_19], %41 {strides = array<i32>} : memref<36x512xbf16, #tpu.memory_space<vmem>>, vector<4x512xbf16>,
    %43 = vector.extract_strided_slice %26 {offsets = [0, 33], sizes = [4, 512], strides = [1, 1]} : vector<4x640xbf16> to vector<4x512xbf16>
    %c16 = arith.constant 16 : index
    %c0_20 = arith.constant 0 : index
    %44 = vector.load %arg12[%c16, %c0_20] : memref<36x512xbf16, #tpu.memory_space<vmem>>, vector<4x512xbf16>
    tpu.vector_store %arg12[%c16, %c0_20], %43 {strides = array<i32>} : memref<36x512xbf16, #tpu.memory_space<vmem>>, vector<4x512xbf16>,
    %45 = vector.extract_strided_slice %26 {offsets = [0, 34], sizes = [4, 512], strides = [1, 1]} : vector<4x640xbf16> to vector<4x512xbf16>
    %46 = vector.broadcast %28 : vector<1x512xbf16> to vector<4x512xbf16>
    %47 = arith.mulf %45, %46 : vector<4x512xbf16>
    %c20 = arith.constant 20 : index
    %c0_21 = arith.constant 0 : index
    %48 = vector.load %arg12[%c20, %c0_21] : memref<36x512xbf16, #tpu.memory_space<vmem>>, vector<4x512xbf16>
    tpu.vector_store %arg12[%c20, %c0_21], %47 {strides = array<i32>} : memref<36x512xbf16, #tpu.memory_space<vmem>>, vector<4x512xbf16>,
    %49 = vector.extract_strided_slice %26 {offsets = [0, 64], sizes = [4, 512], strides = [1, 1]} : vector<4x640xbf16> to vector<4x512xbf16>
    %50 = vector.broadcast %27 : vector<1x512xbf16> to vector<4x512xbf16>
    %51 = arith.mulf %49, %50 : vector<4x512xbf16>
    %c24 = arith.constant 24 : index
    %c0_22 = arith.constant 0 : index
    %52 = vector.load %arg12[%c24, %c0_22] : memref<36x512xbf16, #tpu.memory_space<vmem>>, vector<4x512xbf16>
    tpu.vector_store %arg12[%c24, %c0_22], %51 {strides = array<i32>} : memref<36x512xbf16, #tpu.memory_space<vmem>>, vector<4x512xbf16>,
    %53 = vector.extract_strided_slice %26 {offsets = [0, 65], sizes = [4, 512], strides = [1, 1]} : vector<4x640xbf16> to vector<4x512xbf16>
    %c28 = arith.constant 28 : index
    %c0_23 = arith.constant 0 : index
    %54 = vector.load %arg12[%c28, %c0_23] : memref<36x512xbf16, #tpu.memory_space<vmem>>, vector<4x512xbf16>
    tpu.vector_store %arg12[%c28, %c0_23], %53 {strides = array<i32>} : memref<36x512xbf16, #tpu.memory_space<vmem>>, vector<4x512xbf16>,
    %55 = vector.extract_strided_slice %26 {offsets = [0, 66], sizes = [4, 512], strides = [1, 1]} : vector<4x640xbf16> to vector<4x512xbf16>
    %56 = vector.broadcast %28 : vector<1x512xbf16> to vector<4x512xbf16>
    %57 = arith.mulf %55, %56 : vector<4x512xbf16>
    %c32 = arith.constant 32 : index
    %c0_24 = arith.constant 0 : index
    %58 = vector.load %arg12[%c32, %c0_24] : memref<36x512xbf16, #tpu.memory_space<vmem>>, vector<4x512xbf16>
    tpu.vector_store %arg12[%c32, %c0_24], %57 {strides = array<i32>} : memref<36x512xbf16, #tpu.memory_space<vmem>>, vector<4x512xbf16>,
    %c0_25 = arith.constant 0 : index
    %c0_26 = arith.constant 0 : index
    %59 = vector.load %arg5[%c0_25, %c0_26] : memref<4x36xbf16, #tpu.memory_space<vmem>>, vector<4x36xbf16>
    %c0_27 = arith.constant 0 : index
    %c0_28 = arith.constant 0 : index
    %60 = vector.load %arg12[%c0_27, %c0_28] : memref<36x512xbf16, #tpu.memory_space<vmem>>, vector<36x512xbf16>
    %cst = arith.constant dense<0.000000e+00> : vector<4x512xf32>
    %61 = tpu.matmul %59, %60, %cst {dimension_numbers = #tpu.dot_dimension_numbers<[1], [0], [0], [1], [0, 0, 1, 1], [], []>} : vector<4x36xbf16>, vector<36x512xbf16>, vector<4x512xf32> -> vector<4x512xf32>
    %c0_29 = arith.constant 0 : index
    %c0_30 = arith.constant 0 : index
    %62 = vector.load %arg6[%c0_29, %c0_30] : memref<4x1xf32, #tpu.memory_space<vmem>>, vector<4x1xf32>
    %63 = vector.broadcast %62 : vector<4x1xf32> to vector<4x512xf32>
    %64 = arith.addf %61, %63 : vector<4x512xf32>
    %cst_31 = arith.constant 0.000000e+00 : f32
    %65 = vector.broadcast %cst_31 : f32 to vector<4x512xf32>
    %66 = arith.maximumf %64, %65 : vector<4x512xf32>
    %67 = arith.truncf %66 : vector<4x512xf32> to vector<4x512xbf16>
    %c0_32 = arith.constant 0 : index
    %c0_33 = arith.constant 0 : index
    %68 = vector.load %arg13[%c0_32, %c0_33] : memref<10x512xbf16, #tpu.memory_space<vmem>>, vector<4x512xbf16>
    tpu.vector_store %arg13[%c0_32, %c0_33], %67 {strides = array<i32>} : memref<10x512xbf16, #tpu.memory_space<vmem>>, vector<4x512xbf16>,
    %c0_34 = arith.constant 0 : index
    %c0_35 = arith.constant 0 : index
    %c0_36 = arith.constant 0 : index
    %69 = vector.load %arg3[%c0_34, %c0_35, %c0_36] : memref<1x6x512xbf16, #tpu.memory_space<vmem>>, vector<1x6x512xbf16>
    %70 = vector.shape_cast %69 : vector<1x6x512xbf16> to vector<6x512xbf16>
    %c4_37 = arith.constant 4 : index
    %c0_38 = arith.constant 0 : index
    %71 = vector.load %arg13[%c4_37, %c0_38] : memref<10x512xbf16, #tpu.memory_space<vmem>>, vector<6x512xbf16>
    tpu.vector_store %arg13[%c4_37, %c0_38], %70 {strides = array<i32>} : memref<10x512xbf16, #tpu.memory_space<vmem>>, vector<6x512xbf16>,
    %c0_39 = arith.constant 0 : index
    %c0_40 = arith.constant 0 : index
    %72 = vector.load %arg7[%c0_39, %c0_40] : memref<8x10xbf16, #tpu.memory_space<vmem>>, vector<8x10xbf16>
    %c0_41 = arith.constant 0 : index
    %c0_42 = arith.constant 0 : index
    %73 = vector.load %arg13[%c0_41, %c0_42] : memref<10x512xbf16, #tpu.memory_space<vmem>>, vector<10x512xbf16>
    %cst_43 = arith.constant dense<0.000000e+00> : vector<8x512xf32>
    %74 = tpu.matmul %72, %73, %cst_43 {dimension_numbers = #tpu.dot_dimension_numbers<[1], [0], [0], [1], [0, 0, 1, 1], [], []>} : vector<8x10xbf16>, vector<10x512xbf16>, vector<8x512xf32> -> vector<8x512xf32>
    %c0_44 = arith.constant 0 : index
    %c0_45 = arith.constant 0 : index
    %75 = vector.load %arg8[%c0_44, %c0_45] : memref<8x1xf32, #tpu.memory_space<vmem>>, vector<8x1xf32>
    %76 = vector.broadcast %75 : vector<8x1xf32> to vector<8x512xf32>
    %77 = arith.addf %74, %76 : vector<8x512xf32>
    %cst_46 = arith.constant 0.000000e+00 : f32
    %78 = vector.broadcast %cst_46 : f32 to vector<8x512xf32>
    %79 = arith.maximumf %77, %78 : vector<8x512xf32>
    %80 = arith.truncf %79 : vector<8x512xf32> to vector<8x512xbf16>
    %c0_47 = arith.constant 0 : index
    %c0_48 = arith.constant 0 : index
    %c0_49 = arith.constant 0 : index
    %81 = vector.load %arg9[%c0_47, %c0_48, %c0_49] : memref<1x8x512xbf16, #tpu.memory_space<vmem>>, vector<1x8x512xbf16>
    %82 = vector.shape_cast %81 : vector<1x8x512xbf16> to vector<8x512xbf16>
    %83 = vector.shape_cast %80 : vector<8x512xbf16> to vector<1x8x512xbf16>
    tpu.vector_store %arg9[%c0_47, %c0_48, %c0_49], %83 {strides = array<i32>} : memref<1x8x512xbf16, #tpu.memory_space<vmem>>, vector<1x8x512xbf16>,
    return
  }
  func.func @transform_1(%arg0: i32, %arg1: i32) -> (i32, i32, i32) {
    %c0_i32 = arith.constant 0 : i32
    %c0_i32_0 = arith.constant 0 : i32
    return %arg0, %c0_i32, %arg1 : i32, i32, i32
  }
  func.func @transform_2(%arg0: i32, %arg1: i32) -> (i32, i32) {
    %c0_i32 = arith.constant 0 : i32
    %c0_i32_0 = arith.constant 0 : i32
    %c0_i32_1 = arith.constant 0 : i32
    return %c0_i32, %c0_i32_0 : i32, i32
  }
  func.func @transform_3(%arg0: i32, %arg1: i32) -> (i32, i32) {
    %c0_i32 = arith.constant 0 : i32
    %c0_i32_0 = arith.constant 0 : i32
    %c0_i32_1 = arith.constant 0 : i32
    return %c0_i32, %c0_i32_0 : i32, i32
  }
  func.func @transform_4(%arg0: i32, %arg1: i32) -> (i32, i32) {
    %c0_i32 = arith.constant 0 : i32
    %c0_i32_0 = arith.constant 0 : i32
    %c0_i32_1 = arith.constant 0 : i32
    return %c0_i32, %c0_i32_0 : i32, i32
  }
  func.func @transform_5(%arg0: i32, %arg1: i32) -> (i32, i32) {
    %c0_i32 = arith.constant 0 : i32
    %c0_i32_0 = arith.constant 0 : i32
    %c0_i32_1 = arith.constant 0 : i32
    return %c0_i32, %c0_i32_0 : i32, i32
  }
  func.func @transform_6(%arg0: i32, %arg1: i32) -> (i32, i32) {
    %c0_i32 = arith.constant 0 : i32
    %c0_i32_0 = arith.constant 0 : i32
    %c0_i32_1 = arith.constant 0 : i32
    return %c0_i32, %c0_i32_0 : i32, i32
  }
  func.func @transform_7(%arg0: i32, %arg1: i32) -> (i32, i32, i32) {
    %c0_i32 = arith.constant 0 : i32
    %c0_i32_0 = arith.constant 0 : i32
    return %arg0, %c0_i32, %arg1 : i32, i32, i32
  }
}

</mosaic_0001>

<llo_original>
// kernel: tpu_custom_call.1
$region0: #{tpu_custom_call.1}
  #allocation0 [shape = 'u32[]', space=smem, size = 0x4, offset = 0x4, fixed_abs, tag = 'smem constant byte address 0x4 - core index']
  #allocation1 [shape = 'u32[144,128]{1,0:T(1,128)}', space=vmem, size = 0x12000, scoped, tag = 'internal scratch']
  #allocation2 [shape = 'bf16[2,4,640]{2,1,0:T(4,128)(2,1)}', space=vmem, size = 0x2800, scoped, tag = 'scratch operand']
  #allocation3 [shape = 's32[2]{0}', space=sflag, size = 0x8, scoped, tag = 'scratch operand']
  #allocation4 [shape = 'bf16[36,512]{1,0:T(8,128)(2,1)}', space=vmem, size = 0xa000, scoped, tag = 'scratch operand']
  #allocation5 [shape = 'bf16[10,512]{1,0:T(8,128)(2,1)}', space=vmem, size = 0x4000, scoped, tag = 'scratch operand']
  #allocation8 [shape = 's32[]', space=sflag, size = 0x4, offset = 0, fixed_abs, tag = 'sflag constant byte address 0x0 - dummy sync flag']
  #allocation9 [shape = 's32[]', space=sflag, size = 0x4, offset = 0, fixed_abs, tag = 'sflag constant byte address 0x0 - dummy sync flag']
  %s0 = inlined_call_operand.vmem [shape: bf16[2,4,1152], index: 0, kind: input, shape index: {}]
  %s1 = inlined_call_operand.vmem [shape: bf16[2,6,1024], index: 1, kind: input, shape index: {}]
  %s2 = inlined_call_operand.vmem [shape: bf16[2,512], index: 2, kind: input, shape index: {}]
  %s3 = inlined_call_operand.vmem [shape: bf16[4,36], index: 3, kind: input, shape index: {}]
  %s4 = inlined_call_operand.vmem [shape: f32[4,1], index: 4, kind: input, shape index: {}]
  %s5 = inlined_call_operand.vmem [shape: bf16[8,10], index: 5, kind: input, shape index: {}]
  %s6 = inlined_call_operand.vmem [shape: f32[8,1], index: 6, kind: input, shape index: {}]
  %s7 = inlined_call_operand.hbm [shape: bf16[2,8,1024], index: 7, kind: output, shape index: {}]
  %s8 = sld [smem:[#allocation0]]
  $region139: #{tpu_custom_call.1} parent=0
    _
  %s10 = ssub.s32 1, %s8
  %s11 = scalar_select 0, %s10, %s8
  $region1: #{tpu_custom_call.1} parent=0
    #allocation6 [shape = 'u8[16384]{0}', space=vmem, size = 0x4000, scoped, tag = 'output window, operand 0']
    #allocation7 [shape = 's32[2]{0}', space=sflag, size = 0x8, scoped, tag = 'scoped memory for tpu_custom_call.1']
    %12 = vsyncpa [#allocation7], 0
    %s13 = scalar_lea.sflag [#allocation7], 1
    %14 = vsyncpa %s13, 0
    loop: start=0, step=1, limit=6
    $region2: #{tpu_custom_call.1} parent=1 // loop_pre_header
      _
    $region3: #{tpu_custom_call.1} parent=1 // loop_header
      %s16 = sphi 0, %s20
      %p17 = scmp.ge.s32.totalorder %s16, 6
      %s23 = sphi 0, %s35
      %s24 = sphi 0, %s31
      %s25 = sphi 0, %s23
      %s26 = sphi 0, %s24
      %s27 = sphi 0, %s25
      %s28 = sphi 0, %s26
      %s40 = sphi 0, %s42
      %s43 = sphi 0, %s40
      %s44 = sphi 0, %s43
      %s60 = sphi 0, %s44
      %s64 = sphi 0, %s64
      %s66 = sphi 0, %s64
      %s67 = sphi 0, %s66
      %s81 = sphi 0, %s67
      %s85 = sphi 0, %s85
      %s87 = sphi 0, %s85
      %s88 = sphi 0, %s87
      %s102 = sphi 0, %s88
      %s106 = sphi 0, %s106
      %s108 = sphi 0, %s106
      %s109 = sphi 0, %s108
      %s123 = sphi 0, %s109
      %s127 = sphi 0, %s127
      %s129 = sphi 0, %s127
      %s130 = sphi 0, %s129
      %s144 = sphi 0, %s130
      %s148 = sphi 0, %s148
      %s150 = sphi 0, %s148
      %s151 = sphi 0, %s150
      %s165 = sphi 0, %s151
      %s173 = sphi 0, %s175
      %s176 = sphi 0, %s173
      %s177 = sphi 0, %s176
      %s193 = sphi 0, %s177
    $region4: #{tpu_custom_call.1} parent=1 // loop_header_branch
      %19 = sbr.rel (%p17) target = $region8
    $region5: #{tpu_custom_call.1} parent=1 // loop_body
      %s21 = ssub.s32 %s16, 1
      %s22 = ssub.s32 %s16, 2
      %s29 = sadd.s32 1, %s24
      %p30 = scmp.ge.s32.totalorder %s29, 2
      %s31 = scalar_select %p30, 0, %s29
      %s32 = sadd.s32 1, %s23
      %s33 = scalar_select %p30, %s32, %s23
      %p34 = scmp.ge.s32.totalorder %s33, 2
      %s35 = scalar_select %p34, 0, %s33
      %s36 = ssub.s32 %s23, %s35
      %s37 = ssub.s32 %s24, %s31
      %s38 = sor.u32 %s36, %s37
      %p39 = scmp.eq.s32.totalorder %s38, 0
      %s41 = sadd.s32 %s40, 1
      %s42 = scalar_select %p39, %s40, %s41
      %p45 = pneg %p39
      %p46 = scmp.eq.s32.totalorder %s16, 3
      %p47 = por %p45, %p46
      %p48 = scmp.ne.s32.totalorder %s40, %s43
      %p49 = scmp.eq.s32.totalorder %s16, 0
      %p50 = por %p48, %p49
      %p51 = scmp.ne.s32.totalorder %s40, %s43
      %p52 = scmp.eq.s32.totalorder %s21, 3
      %p53 = por %p51, %p52
      %p54 = scmp.ne.s32.totalorder %s43, %s44
      %p55 = scmp.eq.s32.totalorder %s21, 0
      %p56 = por %p54, %p55
      %p57 = scmp.ne.s32.totalorder %s43, %s44
      %p58 = scmp.eq.s32.totalorder %s22, 3
      %p59 = por %p57, %p58
      %p61 = scmp.ne.s32.totalorder %s44, %s60
      %p62 = scmp.eq.s32.totalorder %s22, 0
      %p63 = por %p61, %p62
      %s65 = sadd.s32 %s64, 1
      %p68 = scmp.eq.s32.totalorder %s16, 3
      %p69 = scmp.ne.s32.totalorder %s64, %s66
      %p70 = scmp.eq.s32.totalorder %s16, 0
      %p71 = por %p69, %p70
      %p72 = scmp.ne.s32.totalorder %s64, %s66
      %p73 = scmp.eq.s32.totalorder %s21, 3
      %p74 = por %p72, %p73
      %p75 = scmp.ne.s32.totalorder %s66, %s67
      %p76 = scmp.eq.s32.totalorder %s21, 0
      %p77 = por %p75, %p76
      %p78 = scmp.ne.s32.totalorder %s66, %s67
      %p79 = scmp.eq.s32.totalorder %s22, 3
      %p80 = por %p78, %p79
      %p82 = scmp.ne.s32.totalorder %s67, %s81
      %p83 = scmp.eq.s32.totalorder %s22, 0
      %p84 = por %p82, %p83
      %s86 = sadd.s32 %s85, 1
      %p89 = scmp.eq.s32.totalorder %s16, 3
      %p90 = scmp.ne.s32.totalorder %s85, %s87
      %p91 = scmp.eq.s32.totalorder %s16, 0
      %p92 = por %p90, %p91
      %p93 = scmp.ne.s32.totalorder %s85, %s87
      %p94 = scmp.eq.s32.totalorder %s21, 3
      %p95 = por %p93, %p94
      %p96 = scmp.ne.s32.totalorder %s87, %s88
      %p97 = scmp.eq.s32.totalorder %s21, 0
      %p98 = por %p96, %p97
      %p99 = scmp.ne.s32.totalorder %s87, %s88
      %p100 = scmp.eq.s32.totalorder %s22, 3
      %p101 = por %p99, %p100
      %p103 = scmp.ne.s32.totalorder %s88, %s102
      %p104 = scmp.eq.s32.totalorder %s22, 0
      %p105 = por %p103, %p104
      %s107 = sadd.s32 %s106, 1
      %p110 = scmp.eq.s32.totalorder %s16, 3
      %p111 = scmp.ne.s32.totalorder %s106, %s108
      %p112 = scmp.eq.s32.totalorder %s16, 0
      %p113 = por %p111, %p112
      %p114 = scmp.ne.s32.totalorder %s106, %s108
      %p115 = scmp.eq.s32.totalorder %s21, 3
      %p116 = por %p114, %p115
      %p117 = scmp.ne.s32.totalorder %s108, %s109
      %p118 = scmp.eq.s32.totalorder %s21, 0
      %p119 = por %p117, %p118
      %p120 = scmp.ne.s32.totalorder %s108, %s109
      %p121 = scmp.eq.s32.totalorder %s22, 3
      %p122 = por %p120, %p121
      %p124 = scmp.ne.s32.totalorder %s109, %s123
      %p125 = scmp.eq.s32.totalorder %s22, 0
      %p126 = por %p124, %p125
      %s128 = sadd.s32 %s127, 1
      %p131 = scmp.eq.s32.totalorder %s16, 3
      %p132 = scmp.ne.s32.totalorder %s127, %s129
      %p133 = scmp.eq.s32.totalorder %s16, 0
      %p134 = por %p132, %p133
      %p135 = scmp.ne.s32.totalorder %s127, %s129
      %p136 = scmp.eq.s32.totalorder %s21, 3
      %p137 = por %p135, %p136
      %p138 = scmp.ne.s32.totalorder %s129, %s130
      %p139 = scmp.eq.s32.totalorder %s21, 0
      %p140 = por %p138, %p139
      %p141 = scmp.ne.s32.totalorder %s129, %s130
      %p142 = scmp.eq.s32.totalorder %s22, 3
      %p143 = por %p141, %p142
      %p145 = scmp.ne.s32.totalorder %s130, %s144
      %p146 = scmp.eq.s32.totalorder %s22, 0
      %p147 = por %p145, %p146
      %s149 = sadd.s32 %s148, 1
      %p152 = scmp.eq.s32.totalorder %s16, 3
      %p153 = scmp.ne.s32.totalorder %s148, %s150
      %p154 = scmp.eq.s32.totalorder %s16, 0
      %p155 = por %p153, %p154
      %p156 = scmp.ne.s32.totalorder %s148, %s150
      %p157 = scmp.eq.s32.totalorder %s21, 3
      %p158 = por %p156, %p157
      %p159 = scmp.ne.s32.totalorder %s150, %s151
      %p160 = scmp.eq.s32.totalorder %s21, 0
      %p161 = por %p159, %p160
      %p162 = scmp.ne.s32.totalorder %s150, %s151
      %p163 = scmp.eq.s32.totalorder %s22, 3
      %p164 = por %p162, %p163
      %p166 = scmp.ne.s32.totalorder %s151, %s165
      %p167 = scmp.eq.s32.totalorder %s22, 0
      %p168 = por %p166, %p167
      %s169 = ssub.s32 %s23, %s35
      %s170 = ssub.s32 %s24, %s31
      %s171 = sor.u32 %s169, %s170
      %p172 = scmp.eq.s32.totalorder %s171, 0
      %s174 = sadd.s32 %s173, 1
      %s175 = scalar_select %p172, %s173, %s174
      %p178 = pneg %p172
      %p179 = scmp.eq.s32.totalorder %s16, 3
      %p180 = por %p178, %p179
      %p181 = scmp.ne.s32.totalorder %s173, %s176
      %p182 = scmp.eq.s32.totalorder %s16, 0
      %p183 = por %p181, %p182
      %p184 = scmp.ne.s32.totalorder %s173, %s176
      %p185 = scmp.eq.s32.totalorder %s21, 3
      %p186 = por %p184, %p185
      %p187 = scmp.ne.s32.totalorder %s176, %s177
      %p188 = scmp.eq.s32.totalorder %s21, 0
      %p189 = por %p187, %p188
      %p190 = scmp.ne.s32.totalorder %s176, %s177
      %p191 = scmp.eq.s32.totalorder %s22, 3
      %p192 = por %p190, %p191
      %p194 = scmp.ne.s32.totalorder %s177, %s193
      %p195 = scmp.eq.s32.totalorder %s22, 0
      %p196 = por %p194, %p195
      %p197 = scmp.le.s32.totalorder 1, %s16
      %p198 = scmp.lt.s32.totalorder %s16, 5
      %p199 = pnand %p197, %p198
      %p200 = pneg %p199
      // Predicated region
      $region9: #{tpu_custom_call.1} parent=5 // pred_check
        _
      $region10: #{tpu_custom_call.1} parent=5 // pred_check_branch
        %202 = sbr.rel (%p199) target = $region12
      $region11: #{tpu_custom_call.1} parent=5 // pred_region
        %s203 = ssub.s32 %s16, 1
        // Predicated region
        $region13: #{tpu_custom_call.1} parent=11 // pred_check
          %p204 = pneg %p77
        $region14: #{tpu_custom_call.1} parent=11 // pred_check_branch
          %206 = sbr.rel (%p204) target = $region16
        $region15: #{tpu_custom_call.1} parent=11 // pred_region
          _
        $region16: #{tpu_custom_call.1} parent=11 // pred_fallthru
          _
        // Predicated region
        $region17: #{tpu_custom_call.1} parent=11 // pred_check
          %p207 = pneg %p98
        $region18: #{tpu_custom_call.1} parent=11 // pred_check_branch
          %209 = sbr.rel (%p207) target = $region20
        $region19: #{tpu_custom_call.1} parent=11 // pred_region
          _
        $region20: #{tpu_custom_call.1} parent=11 // pred_fallthru
          _
        // Predicated region
        $region21: #{tpu_custom_call.1} parent=11 // pred_check
          %p210 = pneg %p119
        $region22: #{tpu_custom_call.1} parent=11 // pred_check_branch
          %212 = sbr.rel (%p210) target = $region24
        $region23: #{tpu_custom_call.1} parent=11 // pred_region
          _
        $region24: #{tpu_custom_call.1} parent=11 // pred_fallthru
          _
        // Predicated region
        $region25: #{tpu_custom_call.1} parent=11 // pred_check
          %p213 = pneg %p140
        $region26: #{tpu_custom_call.1} parent=11 // pred_check_branch
          %215 = sbr.rel (%p213) target = $region28
        $region27: #{tpu_custom_call.1} parent=11 // pred_region
          _
        $region28: #{tpu_custom_call.1} parent=11 // pred_fallthru
          _
        // Predicated region
        $region29: #{tpu_custom_call.1} parent=11 // pred_check
          %p216 = pneg %p161
        $region30: #{tpu_custom_call.1} parent=11 // pred_check_branch
          %218 = sbr.rel (%p216) target = $region32
        $region31: #{tpu_custom_call.1} parent=11 // pred_region
          _
        $region32: #{tpu_custom_call.1} parent=11 // pred_fallthru
          _
      $region12: #{tpu_custom_call.1} parent=5 // pred_fallthru
        _
      %p219 = scmp.lt.s32.totalorder %s16, 4
      // Predicated region
      $region33: #{tpu_custom_call.1} parent=5 // pred_check
        %p220 = pneg %p219
      $region34: #{tpu_custom_call.1} parent=5 // pred_check_branch
        %222 = sbr.rel (%p220) target = $region36
      $region35: #{tpu_custom_call.1} parent=5 // pred_region
        // Predicated region
        $region37: #{tpu_custom_call.1} parent=35 // pred_check
          %p223 = pneg %p50
        $region38: #{tpu_custom_call.1} parent=35 // pred_check_branch
          %225 = sbr.rel (%p223) target = $region40
        $region39: #{tpu_custom_call.1} parent=35 // pred_region
          %s226 = smul.u32 4, %s24
          %p227 = scmp.lt.s32.totalorder %s23, 1
          %s228 = scalar_select %p227, %s23, 1
          %p229 = scmp.lt.s32.totalorder %s226, 7
          %s230 = scalar_select %p229, %s226, 7
          %s231 = smul.addr %s228, 8
          %s232 = sadd.s32 %s230, %s231
          %s233 = smul.addr %s232, 4
          %s234 = scalar_lea.vmem %s1, %s233
          %s235 = smul.u32 4, %s24
        $region40: #{tpu_custom_call.1} parent=35 // pred_fallthru
          _
      $region36: #{tpu_custom_call.1} parent=5 // pred_fallthru
        _
      %p236 = scmp.le.s32.totalorder 1, %s16
      %p237 = scmp.lt.s32.totalorder %s16, 5
      %p238 = pnand %p236, %p237
      %p239 = pneg %p238
      // Predicated region
      $region41: #{tpu_custom_call.1} parent=5 // pred_check
        _
      $region42: #{tpu_custom_call.1} parent=5 // pred_check_branch
        %241 = sbr.rel (%p238) target = $region44
      $region43: #{tpu_custom_call.1} parent=5 // pred_region
        %s242 = ssub.s32 %s16, 1
        %s243 = smul.u32 4, %s26
        %p244 = scmp.lt.s32.totalorder %s25, 1
        %s245 = scalar_select %p244, %s25, 1
        %p246 = scmp.lt.s32.totalorder %s243, 7
        %s247 = scalar_select %p246, %s243, 7
        %s248 = smul.addr %s245, 8
        %s249 = sadd.s32 %s247, %s248
        %s250 = smul.addr %s249, 4
        %s251 = scalar_lea.vmem %s1, %s250
        %p252 = pneg %p56
        %p253 = pneg %p53
        %p254 = pneg %p77
        %p255 = pneg %p74
        %p256 = pneg %p98
        %p257 = pneg %p95
        %p258 = pneg %p119
        %p259 = pneg %p116
        %p260 = pneg %p140
        %p261 = pneg %p137
        %p262 = pneg %p161
        %p263 = pneg %p158
        %p264 = pneg %p189
        %p265 = pneg %p186
        %s266 = sand.u32 %s176, 1
        %s267 = scalar_lea.sflag [#allocation7], %s266
        %s268 = sand.u32 %s176, 1
        %s269 = smul.addr %s268, 16
        %s270 = scalar_lea.vmem [#allocation6], %s269
        %s271 = smul.u32 4, %s26
        %p272 = scmp.lt.s32.totalorder %s25, 1
        %s273 = scalar_select %p272, %s25, 1
        %p274 = scmp.lt.s32.totalorder %s271, 7
        %s275 = scalar_select %p274, %s271, 7
        %s276 = smul.addr %s273, 8
        %s277 = sadd.s32 %s275, %s276
        %s278 = smul.addr %s277, 4
        %s279 = scalar_lea.vmem %s1, %s278
        %s280 = smul.u32 4, %s26
        %s281 = smul.u32 4, %s26
        %p283 = scmp.eq.s32.totalorder %s26, 0
        // Predicated region
        $region45: #{tpu_custom_call.1} parent=43 // pred_check
          %p284 = pneg %p283
        $region46: #{tpu_custom_call.1} parent=43 // pred_check_branch
          %286 = sbr.rel (%p284) target = $region48
        $region47: #{tpu_custom_call.1} parent=43 // pred_region
          %s287 = smul.u32 %s25, 9
          %s288 = smul.addr %s287, 2
          %s289 = scalar_lea.vmem %s0, %s288
          %p291 = scmp.lt.u32.totalorder 10, 8
          %p292 = pneg %p291
          // Predicated region
          $region49: #{tpu_custom_call.1} parent=47 // pred_check
            _
          $region50: #{tpu_custom_call.1} parent=47 // pred_check_branch
            %294 = sbr.rel (%p291) target = $region52
          $region51: #{tpu_custom_call.1} parent=47 // pred_region
            %s310 = sand.u32 10, 7
            %p311 = scmp.eq.s32.totalorder %s310, 0
            %p312 = pneg %p311
            // Predicated region
            $region64: #{tpu_custom_call.1} parent=51 // pred_check
              _
            $region65: #{tpu_custom_call.1} parent=51 // pred_check_branch
              %314 = sbr.rel (%p311) target = $region67
            $region66: #{tpu_custom_call.1} parent=51 // pred_region
              %s315 = sand.u32 10, 7
              %s316 = ssub.s32 10, %s315
              %s317 = scalar_lea.vmem %s289, %s316
              %s318 = ssub.s32 10, %s315
              %s319 = scalar_lea.vmem [#allocation2], %s318
              loop: start=0, step=1, limit=1
              $region68: #{tpu_custom_call.1} parent=66 // loop_pre_header
                _
              $region69: #{tpu_custom_call.1} parent=66 // loop_header
                %s321 = sphi 0, %s325
                %p322 = scmp.ge.s32.totalorder %s321, 1
                %s326 = sphi %s289, %s289
                %s327 = sphi [#allocation2], [#allocation2]
              $region70: #{tpu_custom_call.1} parent=66 // loop_header_branch
                %324 = sbr.rel (%p322) target = $region74
              $region71: #{tpu_custom_call.1} parent=66 // loop_body
                %v328 = vld [vmem:[%s326] sm:$0xff]
                %329 = vst [vmem:[%s327] sm:$0xff] %v328
              $region72: #{tpu_custom_call.1} parent=66 // loop_footer
                %s325 = sadd.s32 1, %s321
              $region73: #{tpu_custom_call.1} parent=66 // loop_footer_branch
                %320 = sbr.rel target = $region69
              $region74: #{tpu_custom_call.1} parent=66 // loop_exit
                _
              %s330 = sshll.u32 1, %s315
              %s331 = ssub.s32 %s330, 1
              loop: start=0, step=1, limit=1
              $region75: #{tpu_custom_call.1} parent=66 // loop_pre_header
                _
              $region76: #{tpu_custom_call.1} parent=66 // loop_header
                %s333 = sphi 0, %s337
                %p334 = scmp.ge.s32.totalorder %s333, 1
                %s338 = sphi %s317, %s317
                %s339 = sphi %s319, %s319
              $region77: #{tpu_custom_call.1} parent=66 // loop_header_branch
                %336 = sbr.rel (%p334) target = $region81
              $region78: #{tpu_custom_call.1} parent=66 // loop_body
                %v340 = vld [vmem:[%s338] sm:%s331]
                %341 = vst [vmem:[%s339] sm:%s331] %v340
              $region79: #{tpu_custom_call.1} parent=66 // loop_footer
                %s337 = sadd.s32 1, %s333
              $region80: #{tpu_custom_call.1} parent=66 // loop_footer_branch
                %332 = sbr.rel target = $region76
              $region81: #{tpu_custom_call.1} parent=66 // loop_exit
                _
            $region67: #{tpu_custom_call.1} parent=51 // pred_fallthru
              _
          $region52: #{tpu_custom_call.1} parent=47 // pred_fallthru
            _
          // Predicated region
          $region53: #{tpu_custom_call.1} parent=47 // pred_check
            %p295 = pneg %p291
          $region54: #{tpu_custom_call.1} parent=47 // pred_check_branch
            %297 = sbr.rel (%p295) target = $region56
          $region55: #{tpu_custom_call.1} parent=47 // pred_region
            %s298 = sshll.u32 1, 10
            %s299 = ssub.s32 %s298, 1
            loop: start=0, step=1, limit=1
            $region57: #{tpu_custom_call.1} parent=55 // loop_pre_header
              _
            $region58: #{tpu_custom_call.1} parent=55 // loop_header
              %s301 = sphi 0, %s305
              %p302 = scmp.ge.s32.totalorder %s301, 1
              %s306 = sphi %s289, %s289
              %s307 = sphi [#allocation2], [#allocation2]
            $region59: #{tpu_custom_call.1} parent=55 // loop_header_branch
              %304 = sbr.rel (%p302) target = $region63
            $region60: #{tpu_custom_call.1} parent=55 // loop_body
              %v308 = vld [vmem:[%s306] sm:%s299]
              %309 = vst [vmem:[%s307] sm:%s299] %v308
            $region61: #{tpu_custom_call.1} parent=55 // loop_footer
              %s305 = sadd.s32 1, %s301
            $region62: #{tpu_custom_call.1} parent=55 // loop_footer_branch
              %300 = sbr.rel target = $region58
            $region63: #{tpu_custom_call.1} parent=55 // loop_exit
              _
          $region56: #{tpu_custom_call.1} parent=47 // pred_fallthru
            _
          // Predicated region
          $region82: #{tpu_custom_call.1} parent=47 // pred_check
            _
          $region83: #{tpu_custom_call.1} parent=47 // pred_check_branch
            %344 = sbr.rel (0) target = $region85
          $region84: #{tpu_custom_call.1} parent=47 // pred_region
            %345 = vsyncadd [#allocation3], 160
          $region85: #{tpu_custom_call.1} parent=47 // pred_fallthru
            _
        $region48: #{tpu_custom_call.1} parent=43 // pred_fallthru
          _
        %p346 = scmp.lt.s32.totalorder %s26, 0
        %s347 = ssub.s32 0, %s26
        %s348 = scalar_select %p346, %s347, %s26
        %s349 = sand.u32 %s348, 1
        %s350 = ssub.s32 0, %s349
        %s351 = scalar_select %p346, %s350, %s349
        %p352 = scmp.ne.s32.totalorder %s351, 0
        %p353 = scmp.lt.s32.totalorder %s351, 0
        %p354 = pnand %p353, %p352
        %p355 = pneg %p354
        %s356 = sadd.s32 %s351, 2
        %s357 = scalar_select %p355, %s356, %s351
        %s358 = smul.u32 %s357, 5
        %s359 = smul.addr %s358, 2
        %s360 = scalar_lea.vmem [#allocation2], %s359
        %s361 = scalar_lea.sflag [#allocation3], %s357
        %s362 = smul.u32 2, 1
        %s363 = smul.u32 %s362, 5
        %s364 = sshll.u32 %s363, 4
        %365 = dma.done %s361, %s364
        %s366 = sadd.s32 %s26, 1
        %p367 = scmp.lt.s32.totalorder %s366, 2
        // Predicated region
        $region86: #{tpu_custom_call.1} parent=43 // pred_check
          %p368 = pneg %p367
        $region87: #{tpu_custom_call.1} parent=43 // pred_check_branch
          %370 = sbr.rel (%p368) target = $region89
        $region88: #{tpu_custom_call.1} parent=43 // pred_region
          %s371 = ssub.s32 1, %s357
          %s372 = smul.u32 %s366, 512
          %s373 = sshra.s32 %s372, 7
          %s374 = sand.u32 %s372, 127
          %s375 = smul.u32 %s25, 9
          %s376 = sadd.s32 %s373, %s375
          %s377 = smul.addr %s376, 2
          %s378 = scalar_lea.vmem %s0, %s377
          %s379 = smul.u32 %s371, 5
          %s380 = smul.addr %s379, 2
          %s381 = scalar_lea.vmem [#allocation2], %s380
          %s382 = scalar_lea.sflag [#allocation3], %s371
          %p384 = scmp.lt.u32.totalorder 10, 8
          %p385 = pneg %p384
          // Predicated region
          $region90: #{tpu_custom_call.1} parent=88 // pred_check
            _
          $region91: #{tpu_custom_call.1} parent=88 // pred_check_branch
            %387 = sbr.rel (%p384) target = $region93
          $region92: #{tpu_custom_call.1} parent=88 // pred_region
            %s403 = sand.u32 10, 7
            %p404 = scmp.eq.s32.totalorder %s403, 0
            %p405 = pneg %p404
            // Predicated region
            $region105: #{tpu_custom_call.1} parent=92 // pred_check
              _
            $region106: #{tpu_custom_call.1} parent=92 // pred_check_branch
              %407 = sbr.rel (%p404) target = $region108
            $region107: #{tpu_custom_call.1} parent=92 // pred_region
              %s408 = sand.u32 10, 7
              %s409 = ssub.s32 10, %s408
              %s410 = scalar_lea.vmem %s378, %s409
              %s411 = ssub.s32 10, %s408
              %s412 = scalar_lea.vmem %s381, %s411 [#allocation2]
              loop: start=0, step=1, limit=1
              $region109: #{tpu_custom_call.1} parent=107 // loop_pre_header
                _
              $region110: #{tpu_custom_call.1} parent=107 // loop_header
                %s414 = sphi 0, %s418
                %p415 = scmp.ge.s32.totalorder %s414, 1
                %s419 = sphi %s378, %s378
                %s420 = sphi %s381, %s381
              $region111: #{tpu_custom_call.1} parent=107 // loop_header_branch
                %417 = sbr.rel (%p415) target = $region115
              $region112: #{tpu_custom_call.1} parent=107 // loop_body
                %v421 = vld [vmem:[%s419] sm:$0xff]
                %422 = vst [vmem:[%s420] sm:$0xff] %v421
              $region113: #{tpu_custom_call.1} parent=107 // loop_footer
                %s418 = sadd.s32 1, %s414
              $region114: #{tpu_custom_call.1} parent=107 // loop_footer_branch
                %413 = sbr.rel target = $region110
              $region115: #{tpu_custom_call.1} parent=107 // loop_exit
                _
              %s423 = sshll.u32 1, %s408
              %s424 = ssub.s32 %s423, 1
              loop: start=0, step=1, limit=1
              $region116: #{tpu_custom_call.1} parent=107 // loop_pre_header
                _
              $region117: #{tpu_custom_call.1} parent=107 // loop_header
                %s426 = sphi 0, %s430
                %p427 = scmp.ge.s32.totalorder %s426, 1
                %s431 = sphi %s410, %s410
                %s432 = sphi %s412, %s412
              $region118: #{tpu_custom_call.1} parent=107 // loop_header_branch
                %429 = sbr.rel (%p427) target = $region122
              $region119: #{tpu_custom_call.1} parent=107 // loop_body
                %v433 = vld [vmem:[%s431] sm:%s424]
                %434 = vst [vmem:[%s432] sm:%s424] %v433
              $region120: #{tpu_custom_call.1} parent=107 // loop_footer
                %s430 = sadd.s32 1, %s426
              $region121: #{tpu_custom_call.1} parent=107 // loop_footer_branch
                %425 = sbr.rel target = $region117
              $region122: #{tpu_custom_call.1} parent=107 // loop_exit
                _
            $region108: #{tpu_custom_call.1} parent=92 // pred_fallthru
              _
          $region93: #{tpu_custom_call.1} parent=88 // pred_fallthru
            _
          // Predicated region
          $region94: #{tpu_custom_call.1} parent=88 // pred_check
            %p388 = pneg %p384
          $region95: #{tpu_custom_call.1} parent=88 // pred_check_branch
            %390 = sbr.rel (%p388) target = $region97
          $region96: #{tpu_custom_call.1} parent=88 // pred_region
            %s391 = sshll.u32 1, 10
            %s392 = ssub.s32 %s391, 1
            loop: start=0, step=1, limit=1
            $region98: #{tpu_custom_call.1} parent=96 // loop_pre_header
              _
            $region99: #{tpu_custom_call.1} parent=96 // loop_header
              %s394 = sphi 0, %s398
              %p395 = scmp.ge.s32.totalorder %s394, 1
              %s399 = sphi %s378, %s378
              %s400 = sphi %s381, %s381
            $region100: #{tpu_custom_call.1} parent=96 // loop_header_branch
              %397 = sbr.rel (%p395) target = $region104
            $region101: #{tpu_custom_call.1} parent=96 // loop_body
              %v401 = vld [vmem:[%s399] sm:%s392]
              %402 = vst [vmem:[%s400] sm:%s392] %v401
            $region102: #{tpu_custom_call.1} parent=96 // loop_footer
              %s398 = sadd.s32 1, %s394
            $region103: #{tpu_custom_call.1} parent=96 // loop_footer_branch
              %393 = sbr.rel target = $region99
            $region104: #{tpu_custom_call.1} parent=96 // loop_exit
              _
          $region97: #{tpu_custom_call.1} parent=88 // pred_fallthru
            _
          // Predicated region
          $region123: #{tpu_custom_call.1} parent=88 // pred_check
            _
          $region124: #{tpu_custom_call.1} parent=88 // pred_check_branch
            %437 = sbr.rel (0) target = $region126
          $region125: #{tpu_custom_call.1} parent=88 // pred_region
            %438 = vsyncadd %s382, 160
          $region126: #{tpu_custom_call.1} parent=88 // pred_fallthru
            _
        $region89: #{tpu_custom_call.1} parent=43 // pred_fallthru
          _
        %v439 = vld [vmem:[%s360] sm:$0xff]
        %v440 = vld [vmem:[%s360 + $0x8] sm:$0x3]
        %v441 = vld [vmem:[%s2] sm:$0xf]
        %v444 = vunpack.c.l.s4 1966171168
        %v445 = vunpack.c.0.s8 %v444
        %v446 = vlaneseq
        %v447 = vshrl.u32 %v446, 7
        %v448 = vsub.s32 %v445, %v447
        %v449 = vrot.slane %v441, %v448
        %v450 = vcombine.high %v449, %v449
        %v452 = vunpack.c.l.s4 1966171168
        %v453 = vunpack.c.0.s8 %v452
        %v454 = vlaneseq
        %v455 = vshrl.u32 %v454, 7
        %v456 = vsub.s32 %v453, %v455
        %v457 = vrot.slane %v449, %v456
        %v459 = vunpack.c.l.s4 1966171168
        %v460 = vunpack.c.0.s8 %v459
        %v461 = vlaneseq
        %v462 = vshrl.u32 %v461, 7
        %v463 = vsub.s32 %v460, %v462
        %v464 = vrot.slane %v450, %v463
        %v465 = vcombine.high %v457, %v457
        %v466 = vcombine.high %v464, %v464
        %v468 = vpack.i.b16 %v457, %v457
        %v470 = vlaneseq
        %v471 = vshrl.u32 %v470, 7
        %v472 = vsub.s32 0, %v471
        %v473 = vrot.slane %v468, %v472
        %v475 = vpack.i.b16 %v464, %v464
        %v477 = vlaneseq
        %v478 = vshrl.u32 %v477, 7
        %v479 = vsub.s32 0, %v478
        %v480 = vrot.slane %v475, %v479
        %v482 = vpack.i.b16 %v465, %v465
        %v484 = vlaneseq
        %v485 = vshrl.u32 %v484, 7
        %v486 = vsub.s32 0, %v485
        %v487 = vrot.slane %v482, %v486
        %v489 = vpack.i.b16 %v466, %v466
        %v491 = vlaneseq
        %v492 = vshrl.u32 %v491, 7
        %v493 = vsub.s32 0, %v492
        %v494 = vrot.slane %v489, %v493
        %v499 = vcombine.low %v473, %v480
        %v500 = vcombine.low %v487, %v494
        %v502 = vunpack.c.l.s4 1983009808
        %v503 = vunpack.c.0.s8 %v502
        %v504 = vlaneseq
        %v505 = vshrl.u32 %v504, 7
        %v506 = vsub.s32 %v503, %v505
        %v507 = vrot.slane %v499, %v506
        %v509 = vunpack.c.l.s4 1983009808
        %v510 = vunpack.c.0.s8 %v509
        %v511 = vlaneseq
        %v512 = vshrl.u32 %v511, 7
        %v513 = vsub.s32 %v510, %v512
        %v514 = vrot.slane %v500, %v513
        %v515 = vcombine.low %v507, %v514
        %v517 = vmul.bf16 %v439, %v515
        %v519 = vcombine.high %v517, %v517
        %v521 = vunpack.c.l.s4 1983009808
        %v522 = vunpack.c.0.s8 %v521
        %v523 = vlaneseq
        %v524 = vshrl.u32 %v523, 7
        %v525 = vsub.s32 %v522, %v524
        %v526 = vrot.slane %v517, %v525
        %v528 = vunpack.c.l.s4 1983009808
        %v529 = vunpack.c.0.s8 %v528
        %v530 = vlaneseq
        %v531 = vshrl.u32 %v530, 7
        %v532 = vsub.s32 %v529, %v531
        %v533 = vrot.slane %v519, %v532
        %536 = vst [vmem:[#allocation4] sm:$0x33] %v526
        %537 = vst [vmem:[#allocation4 + $0x8] sm:$0x33] %v533
        %v540 = vcombine.low %v439, %v439
        %v542 = vunpack.c.l.s4 1983009808
        %v543 = vunpack.c.0.s8 %v542
        %v544 = vlaneseq
        %v545 = vshrl.u32 %v544, 7
        %v546 = vsub.s32 %v543, %v545
        %v547 = vrot.slane %v540, %v546
        %v549 = vunpack.c.l.s4 1983009808
        %v550 = vunpack.c.0.s8 %v549
        %v551 = vlaneseq
        %v552 = vshrl.u32 %v551, 7
        %v553 = vsub.s32 %v550, %v552
        %v554 = vrot.slane %v439, %v553
        %v555 = vcombine.low %v440, %v440
        %v557 = vunpack.c.l.s4 1983009808
        %v558 = vunpack.c.0.s8 %v557
        %v559 = vlaneseq
        %v560 = vshrl.u32 %v559, 7
        %v561 = vsub.s32 %v558, %v560
        %v562 = vrot.slane %v555, %v561
        %563 = vrot.lane.b32.xlu0 %v547, 127
        %v564 = vpop.permute.xlu0 %563
        %565 = vrot.lane.b32.xlu0 %v554, 127
        %v566 = vpop.permute.xlu0 %565
        %567 = vrot.lane.b32.xlu0 %v562, 127
        %v568 = vpop.permute.xlu0 %567
        %v569 = vrot.slane %v564, 4
        %v570 = vrot.slane %v566, 4
        %v571 = vrot.slane %v568, 4
        %vm572 = vcmask 1043456
        %v573 = vsel %vm572, %v569, %v570
        %vm574 = vcmask 1039360
        %v575 = vsel %vm574, %v564, %v573
        %v576 = vsel %vm572, %v570, %v571
        %v577 = vsel %vm574, %v566, %v576
        %580 = vst [vmem:[#allocation4] sm:$0xcc] %v575
        %581 = vst [vmem:[#allocation4 + $0x8] sm:$0xcc] %v577
        %v582 = vshrl.u32 %v457, 16
        %v583 = vpack.i.b16 %v582, %v582
        %v585 = vlaneseq
        %v586 = vshrl.u32 %v585, 7
        %v587 = vsub.s32 0, %v586
        %v588 = vrot.slane %v583, %v587
        %v589 = vshrl.u32 %v464, 16
        %v590 = vpack.i.b16 %v589, %v589
        %v592 = vlaneseq
        %v593 = vshrl.u32 %v592, 7
        %v594 = vsub.s32 0, %v593
        %v595 = vrot.slane %v590, %v594
        %v596 = vshrl.u32 %v465, 16
        %v597 = vpack.i.b16 %v596, %v596
        %v599 = vlaneseq
        %v600 = vshrl.u32 %v599, 7
        %v601 = vsub.s32 0, %v600
        %v602 = vrot.slane %v597, %v601
        %v603 = vshrl.u32 %v466, 16
        %v604 = vpack.i.b16 %v603, %v603
        %v606 = vlaneseq
        %v607 = vshrl.u32 %v606, 7
        %v608 = vsub.s32 0, %v607
        %v609 = vrot.slane %v604, %v608
        %v614 = vcombine.low %v588, %v595
        %v615 = vcombine.low %v602, %v609
        %v617 = vunpack.c.l.s4 1983009808
        %v618 = vunpack.c.0.s8 %v617
        %v619 = vlaneseq
        %v620 = vshrl.u32 %v619, 7
        %v621 = vsub.s32 %v618, %v620
        %v622 = vrot.slane %v614, %v621
        %v624 = vunpack.c.l.s4 1983009808
        %v625 = vunpack.c.0.s8 %v624
        %v626 = vlaneseq
        %v627 = vshrl.u32 %v626, 7
        %v628 = vsub.s32 %v625, %v627
        %v629 = vrot.slane %v615, %v628
        %v630 = vcombine.low %v622, %v629
        %631 = vrot.lane.b32.xlu0 %v630, 2
        %v632 = vpop.permute.xlu0 %631
        %v633 = vrot.slane %v632, 6
        %vm634 = vcmask 15360
        %v635 = vsel %vm634, %v633, %v632
        %v638 = vmul.bf16 %v439, %v635
        %v639 = vmul.bf16 %v440, %v633
        %v642 = vcombine.high %v638, %v638
        %v644 = vunpack.c.l.s4 1983009808
        %v645 = vunpack.c.0.s8 %v644
        %v646 = vlaneseq
        %v647 = vshrl.u32 %v646, 7
        %v648 = vsub.s32 %v645, %v647
        %v649 = vrot.slane %v638, %v648
        %v651 = vunpack.c.l.s4 1983009808
        %v652 = vunpack.c.0.s8 %v651
        %v653 = vlaneseq
        %v654 = vshrl.u32 %v653, 7
        %v655 = vsub.s32 %v652, %v654
        %v656 = vrot.slane %v642, %v655
        %v658 = vunpack.c.l.s4 1983009808
        %v659 = vunpack.c.0.s8 %v658
        %v660 = vlaneseq
        %v661 = vshrl.u32 %v660, 7
        %v662 = vsub.s32 %v659, %v661
        %v663 = vrot.slane %v639, %v662
        %664 = vrot.lane.b32.xlu0 %v649, 126
        %v665 = vpop.permute.xlu0 %664
        %666 = vrot.lane.b32.xlu0 %v656, 126
        %v667 = vpop.permute.xlu0 %666
        %668 = vrot.lane.b32.xlu0 %v663, 126
        %v669 = vpop.permute.xlu0 %668
        %v670 = vrot.slane %v665, 4
        %v671 = vrot.slane %v667, 4
        %v672 = vrot.slane %v669, 4
        %v673 = vsel %vm572, %v670, %v671
        %vm674 = vcmask 1031168
        %v675 = vsel %vm674, %v665, %v673
        %v676 = vsel %vm572, %v671, %v672
        %v677 = vsel %vm674, %v667, %v676
        %680 = vst [vmem:[#allocation4 + $0x10] sm:$0x33] %v675
        %681 = vst [vmem:[#allocation4 + $0x18] sm:$0x33] %v677
        %682 = vrot.lane.b32.xlu0 %v515, 32
        %v683 = vpop.permute.xlu0 %682
        %v684 = vrot.slane %v683, 6
        %vm685 = vcmask 261120
        %v686 = vsel %vm685, %v684, %v683
        %v689 = vmul.bf16 %v439, %v686
        %v690 = vmul.bf16 %v440, %v684
        %v693 = vcombine.low %v689, %v689
        %v695 = vunpack.c.l.s4 1983009808
        %v696 = vunpack.c.0.s8 %v695
        %v697 = vlaneseq
        %v698 = vshrl.u32 %v697, 7
        %v699 = vsub.s32 %v696, %v698
        %v700 = vrot.slane %v693, %v699
        %v702 = vunpack.c.l.s4 1983009808
        %v703 = vunpack.c.0.s8 %v702
        %v704 = vlaneseq
        %v705 = vshrl.u32 %v704, 7
        %v706 = vsub.s32 %v703, %v705
        %v707 = vrot.slane %v689, %v706
        %v708 = vcombine.low %v690, %v690
        %v710 = vunpack.c.l.s4 1983009808
        %v711 = vunpack.c.0.s8 %v710
        %v712 = vlaneseq
        %v713 = vshrl.u32 %v712, 7
        %v714 = vsub.s32 %v711, %v713
        %v715 = vrot.slane %v708, %v714
        %716 = vrot.lane.b32.xlu0 %v700, 96
        %v717 = vpop.permute.xlu0 %716
        %718 = vrot.lane.b32.xlu0 %v707, 96
        %v719 = vpop.permute.xlu0 %718
        %720 = vrot.lane.b32.xlu0 %v715, 96
        %v721 = vpop.permute.xlu0 %720
        %v722 = vrot.slane %v717, 4
        %v723 = vrot.slane %v719, 4
        %v724 = vrot.slane %v721, 4
        %v725 = vsel %vm572, %v722, %v723
        %vm726 = vcmask 785408
        %v727 = vsel %vm726, %v717, %v725
        %v728 = vsel %vm572, %v723, %v724
        %v729 = vsel %vm726, %v719, %v728
        %732 = vst [vmem:[#allocation4 + $0x10] sm:$0xcc] %v727
        %733 = vst [vmem:[#allocation4 + $0x18] sm:$0xcc] %v729
        %v734 = vcombine.high %v439, %v439
        %v736 = vunpack.c.l.s4 1983009808
        %v737 = vunpack.c.0.s8 %v736
        %v738 = vlaneseq
        %v739 = vshrl.u32 %v738, 7
        %v740 = vsub.s32 %v737, %v739
        %v741 = vrot.slane %v734, %v740
        %v743 = vunpack.c.l.s4 1983009808
        %v744 = vunpack.c.0.s8 %v743
        %v745 = vlaneseq
        %v746 = vshrl.u32 %v745, 7
        %v747 = vsub.s32 %v744, %v746
        %v748 = vrot.slane %v440, %v747
        %749 = vrot.lane.b32.xlu0 %v554, 95
        %v750 = vpop.permute.xlu0 %749
        %751 = vrot.lane.b32.xlu0 %v741, 95
        %v752 = vpop.permute.xlu0 %751
        %753 = vrot.lane.b32.xlu0 %v748, 95
        %v754 = vpop.permute.xlu0 %753
        %v755 = vrot.slane %v750, 4
        %v756 = vrot.slane %v752, 4
        %v757 = vrot.slane %v754, 4
        %v758 = vsel %vm572, %v755, %v756
        %vm759 = vcmask 777216
        %v760 = vsel %vm759, %v750, %v758
        %v761 = vsel %vm572, %v756, %v757
        %v762 = vsel %vm759, %v752, %v761
        %765 = vst [vmem:[#allocation4 + $0x20] sm:$0x33] %v760
        %766 = vst [vmem:[#allocation4 + $0x28] sm:$0x33] %v762
        %767 = vrot.lane.b32.xlu0 %v630, 34
        %v768 = vpop.permute.xlu0 %767
        %v769 = vrot.slane %v768, 6
        %vm770 = vcmask 277504
        %v771 = vsel %vm770, %v769, %v768
        %v774 = vmul.bf16 %v439, %v771
        %v775 = vmul.bf16 %v440, %v769
        %v778 = vcombine.low %v774, %v774
        %v780 = vunpack.c.l.s4 1983009808
        %v781 = vunpack.c.0.s8 %v780
        %v782 = vlaneseq
        %v783 = vshrl.u32 %v782, 7
        %v784 = vsub.s32 %v781, %v783
        %v785 = vrot.slane %v778, %v784
        %v787 = vunpack.c.l.s4 1983009808
        %v788 = vunpack.c.0.s8 %v787
        %v789 = vlaneseq
        %v790 = vshrl.u32 %v789, 7
        %v791 = vsub.s32 %v788, %v790
        %v792 = vrot.slane %v774, %v791
        %v793 = vcombine.low %v775, %v775
        %v795 = vunpack.c.l.s4 1983009808
        %v796 = vunpack.c.0.s8 %v795
        %v797 = vlaneseq
        %v798 = vshrl.u32 %v797, 7
        %v799 = vsub.s32 %v796, %v798
        %v800 = vrot.slane %v793, %v799
        %801 = vrot.lane.b32.xlu0 %v785, 94
        %v802 = vpop.permute.xlu0 %801
        %803 = vrot.lane.b32.xlu0 %v792, 94
        %v804 = vpop.permute.xlu0 %803
        %805 = vrot.lane.b32.xlu0 %v800, 94
        %v806 = vpop.permute.xlu0 %805
        %v807 = vrot.slane %v802, 4
        %v808 = vrot.slane %v804, 4
        %v809 = vrot.slane %v806, 4
        %v810 = vsel %vm572, %v807, %v808
        %vm811 = vcmask 769024
        %v812 = vsel %vm811, %v802, %v810
        %v813 = vsel %vm572, %v808, %v809
        %v814 = vsel %vm811, %v804, %v813
        %817 = vst [vmem:[#allocation4 + $0x20] sm:$0xcc] %v812
        %818 = vst [vmem:[#allocation4 + $0x28] sm:$0xcc] %v814
        %819 = vrot.lane.b32.xlu0 %v515, 64
        %v820 = vpop.permute.xlu0 %819
        %v821 = vrot.slane %v820, 6
        %vm822 = vcmask 523264
        %v823 = vsel %vm822, %v821, %v820
        %v826 = vmul.bf16 %v439, %v823
        %v827 = vmul.bf16 %v440, %v821
        %v830 = vcombine.high %v826, %v826
        %v832 = vunpack.c.l.s4 1983009808
        %v833 = vunpack.c.0.s8 %v832
        %v834 = vlaneseq
        %v835 = vshrl.u32 %v834, 7
        %v836 = vsub.s32 %v833, %v835
        %v837 = vrot.slane %v826, %v836
        %v839 = vunpack.c.l.s4 1983009808
        %v840 = vunpack.c.0.s8 %v839
        %v841 = vlaneseq
        %v842 = vshrl.u32 %v841, 7
        %v843 = vsub.s32 %v840, %v842
        %v844 = vrot.slane %v830, %v843
        %v846 = vunpack.c.l.s4 1983009808
        %v847 = vunpack.c.0.s8 %v846
        %v848 = vlaneseq
        %v849 = vshrl.u32 %v848, 7
        %v850 = vsub.s32 %v847, %v849
        %v851 = vrot.slane %v827, %v850
        %852 = vrot.lane.b32.xlu0 %v837, 64
        %v853 = vpop.permute.xlu0 %852
        %854 = vrot.lane.b32.xlu0 %v844, 64
        %v855 = vpop.permute.xlu0 %854
        %856 = vrot.lane.b32.xlu0 %v851, 64
        %v857 = vpop.permute.xlu0 %856
        %v858 = vrot.slane %v853, 4
        %v859 = vrot.slane %v855, 4
        %v860 = vrot.slane %v857, 4
        %v861 = vsel %vm572, %v858, %v859
        %v862 = vsel %vm822, %v853, %v861
        %v863 = vsel %vm572, %v859, %v860
        %v864 = vsel %vm822, %v855, %v863
        %867 = vst [vmem:[#allocation4 + $0x30] sm:$0x33] %v862
        %868 = vst [vmem:[#allocation4 + $0x38] sm:$0x33] %v864
        %869 = vrot.lane.b32.xlu0 %v547, 63
        %v870 = vpop.permute.xlu0 %869
        %871 = vrot.lane.b32.xlu0 %v554, 63
        %v872 = vpop.permute.xlu0 %871
        %873 = vrot.lane.b32.xlu0 %v562, 63
        %v874 = vpop.permute.xlu0 %873
        %v875 = vrot.slane %v870, 4
        %v876 = vrot.slane %v872, 4
        %v877 = vrot.slane %v874, 4
        %v878 = vsel %vm572, %v875, %v876
        %vm879 = vcmask 515072
        %v880 = vsel %vm879, %v870, %v878
        %v881 = vsel %vm572, %v876, %v877
        %v882 = vsel %vm879, %v872, %v881
        %885 = vst [vmem:[#allocation4 + $0x30] sm:$0xcc] %v880
        %886 = vst [vmem:[#allocation4 + $0x38] sm:$0xcc] %v882
        %887 = vrot.lane.b32.xlu0 %v630, 66
        %v888 = vpop.permute.xlu0 %887
        %v889 = vrot.slane %v888, 6
        %vm890 = vcmask 539648
        %v891 = vsel %vm890, %v889, %v888
        %v894 = vmul.bf16 %v439, %v891
        %v895 = vmul.bf16 %v440, %v889
        %v898 = vcombine.high %v894, %v894
        %v900 = vunpack.c.l.s4 1983009808
        %v901 = vunpack.c.0.s8 %v900
        %v902 = vlaneseq
        %v903 = vshrl.u32 %v902, 7
        %v904 = vsub.s32 %v901, %v903
        %v905 = vrot.slane %v894, %v904
        %v907 = vunpack.c.l.s4 1983009808
        %v908 = vunpack.c.0.s8 %v907
        %v909 = vlaneseq
        %v910 = vshrl.u32 %v909, 7
        %v911 = vsub.s32 %v908, %v910
        %v912 = vrot.slane %v898, %v911
        %v914 = vunpack.c.l.s4 1983009808
        %v915 = vunpack.c.0.s8 %v914
        %v916 = vlaneseq
        %v917 = vshrl.u32 %v916, 7
        %v918 = vsub.s32 %v915, %v917
        %v919 = vrot.slane %v895, %v918
        %920 = vrot.lane.b32.xlu0 %v905, 62
        %v921 = vpop.permute.xlu0 %920
        %922 = vrot.lane.b32.xlu0 %v912, 62
        %v923 = vpop.permute.xlu0 %922
        %924 = vrot.lane.b32.xlu0 %v919, 62
        %v925 = vpop.permute.xlu0 %924
        %v926 = vrot.slane %v921, 4
        %v927 = vrot.slane %v923, 4
        %v928 = vrot.slane %v925, 4
        %v929 = vsel %vm572, %v926, %v927
        %vm930 = vcmask 506880
        %v931 = vsel %vm930, %v921, %v929
        %v932 = vsel %vm572, %v927, %v928
        %v933 = vsel %vm930, %v923, %v932
        %936 = vst [vmem:[#allocation4 + $0x40] sm:$0x33] %v931
        %937 = vst [vmem:[#allocation4 + $0x48] sm:$0x33] %v933
        %v938 = vld [vmem:[%s3] sm:$0x3]
        %v939 = vld [vmem:[#allocation4] sm:$0xff]
        %v940 = vld [vmem:[#allocation4 + $0x8] sm:$0xff]
        %v941 = vld [vmem:[#allocation4 + $0x10] sm:$0xff]
        %v942 = vld [vmem:[#allocation4 + $0x18] sm:$0xff]
        %v943 = vld [vmem:[#allocation4 + $0x20] sm:$0xff]
        %v944 = vld [vmem:[#allocation4 + $0x28] sm:$0xff]
        %v945 = vld [vmem:[#allocation4 + $0x30] sm:$0xff]
        %v946 = vld [vmem:[#allocation4 + $0x38] sm:$0xff]
        %v947 = vld [vmem:[#allocation4 + $0x40] sm:$0x33]
        %v948 = vld [vmem:[#allocation4 + $0x48] sm:$0x33]
        %v949 = vld [vmem:[%s4] sm:$0xf]
        %951 = vset.pattern.permute.xlu0 0
        %952 = vperm.xlu0 %951, %v949
        %v953 = vpop.permute.xlu0 %952
        %v965 = vunpack.c.l.b16 %v939
        %v966 = vunpack.c.h.b16 %v939
        %v967 = vunpack.c.l.b16 %v940
        %v968 = vunpack.c.h.b16 %v940
        %v969 = vunpack.c.l.b16 %v941
        %v970 = vunpack.c.h.b16 %v941
        %v971 = vunpack.c.l.b16 %v942
        %v972 = vunpack.c.h.b16 %v942
        %v973 = vunpack.c.l.b16 %v943
        %v974 = vunpack.c.h.b16 %v943
        %v975 = vunpack.c.l.b16 %v944
        %v976 = vunpack.c.h.b16 %v944
        %v977 = vunpack.c.l.b16 %v945
        %v978 = vunpack.c.h.b16 %v945
        %v979 = vunpack.c.l.b16 %v946
        %v980 = vunpack.c.h.b16 %v946
        %v981 = vunpack.c.l.b16 %v947
        %v982 = vunpack.c.h.b16 %v947
        %v983 = vunpack.c.l.b16 %v948
        %v984 = vunpack.c.h.b16 %v948
        %v985 = vpack.c.b16 %v969, %v965
        %v986 = vpack.c.b16 %v970, %v966
        %v987 = vpack.c.b16 %v971, %v967
        %v988 = vpack.c.b16 %v972, %v968
        %v989 = vpack.c.b16 %v977, %v973
        %v990 = vpack.c.b16 %v978, %v974
        %v991 = vpack.c.b16 %v979, %v975
        %v992 = vpack.c.b16 %v980, %v976
        %v993 = vpack.c.b16 %v981, %v981
        %v994 = vpack.c.b16 %v982, %v982
        %v995 = vpack.c.b16 %v983, %v983
        %v996 = vpack.c.b16 %v984, %v984
        %vm1005 = vcmask 293888
        %v1007 = vsel %vm1005, %v938, 0
        %vm1009 = vcmask 1041408
        %v1011 = vsel %vm1009, %v993, 0
        %v1014 = vsel %vm1009, %v994, 0
        %v1017 = vsel %vm1009, %v995, 0
        %v1020 = vsel %vm1009, %v996, 0
        %1022 = vmatprep.subr.bf16.mxu0 0
        %1023 = vmatpush1.bf16.msra.mxu0 0
        %1024 = vmatprep.subr.bf16.mxu0 0
        %1025 = vmatpush1.bf16.msra.mxu0 0
        %1026 = vmatprep.subr.bf16.mxu0 0
        %1027 = vmatpush1.bf16.msra.mxu0 0
        %1028 = vmatprep.subr.bf16.mxu0 0
        %1029 = vmatpush1.bf16.msra.mxu0 0
        %1030 = vmatprep.subr.bf16.mxu0 0
        %1031 = vmatpush1.bf16.msra.mxu0 0
        %1032 = vmatprep.subr.bf16.mxu0 %v1014
        %1033 = vmatpush1.bf16.msra.mxu0 %v1011
        %1034 = vmatprep.subr.bf16.mxu0 %v990
        %1035 = vmatpush1.bf16.msra.mxu0 %v989
        %1036 = vmatprep.subr.bf16.mxu0 %v986
        %1037 = vmatpush1.bf16.msra.mxu0 %v985
        %1038 = vmatprep.subr.bf16.mxu0 0
        %1039 = vmatpush2.bf16.msra.mxu0 0
        %1040 = vmatprep.subr.bf16.mxu0 0
        %1041 = vmatpush2.bf16.msra.mxu0 0
        %1042 = vmatprep.subr.bf16.mxu0 0
        %1043 = vmatpush2.bf16.msra.mxu0 0
        %1044 = vmatprep.subr.bf16.mxu0 0
        %1045 = vmatpush2.bf16.msra.mxu0 0
        %1046 = vmatprep.subr.bf16.mxu0 0
        %1047 = vmatpush2.bf16.msra.mxu0 0
        %1048 = vmatprep.subr.bf16.mxu0 0
        %1049 = vmatpush2.bf16.msra.mxu0 0
        %1050 = vmatprep.subr.bf16.mxu0 0
        %1051 = vmatpush2.bf16.msra.mxu0 0
        %1052 = vmatprep.subr.bf16.mxu0 0
        %1053 = vmatpush2.bf16.msra.mxu0 0
        %1054 = vmatprep.mubr.bf16.mxu0 0
        %1055 = vmatmul.mubr.bf16.gmra.mxu0 %v1007
        %v1056 = vpop.f32.mrf.mxu0
        %v1057 = vadd.f32 %v953, %v1056
        %v1058 = vpop.f32.mrf.mxu0
        %v1059 = vadd.f32 %v953, %v1058
        %v1060 = vpop.f32.mrf.mxu0
        %v1061 = vpop.f32.mrf.mxu0
        %1062 = vdwg.mxu0
        %1063 = vmatprep.subr.bf16.mxu0 0
        %1064 = vmatpush1.bf16.msra.mxu0 0
        %1065 = vmatprep.subr.bf16.mxu0 0
        %1066 = vmatpush1.bf16.msra.mxu0 0
        %1067 = vmatprep.subr.bf16.mxu0 0
        %1068 = vmatpush1.bf16.msra.mxu0 0
        %1069 = vmatprep.subr.bf16.mxu0 0
        %1070 = vmatpush1.bf16.msra.mxu0 0
        %1071 = vmatprep.subr.bf16.mxu0 0
        %1072 = vmatpush1.bf16.msra.mxu0 0
        %1073 = vmatprep.subr.bf16.mxu0 %v1020
        %1074 = vmatpush1.bf16.msra.mxu0 %v1017
        %1075 = vmatprep.subr.bf16.mxu0 %v992
        %1076 = vmatpush1.bf16.msra.mxu0 %v991
        %1077 = vmatprep.subr.bf16.mxu0 %v988
        %1078 = vmatpush1.bf16.msra.mxu0 %v987
        %1079 = vmatprep.subr.bf16.mxu0 0
        %1080 = vmatpush2.bf16.msra.mxu0 0
        %1081 = vmatprep.subr.bf16.mxu0 0
        %1082 = vmatpush2.bf16.msra.mxu0 0
        %1083 = vmatprep.subr.bf16.mxu0 0
        %1084 = vmatpush2.bf16.msra.mxu0 0
        %1085 = vmatprep.subr.bf16.mxu0 0
        %1086 = vmatpush2.bf16.msra.mxu0 0
        %1087 = vmatprep.subr.bf16.mxu0 0
        %1088 = vmatpush2.bf16.msra.mxu0 0
        %1089 = vmatprep.subr.bf16.mxu0 0
        %1090 = vmatpush2.bf16.msra.mxu0 0
        %1091 = vmatprep.subr.bf16.mxu0 0
        %1092 = vmatpush2.bf16.msra.mxu0 0
        %1093 = vmatprep.subr.bf16.mxu0 0
        %1094 = vmatpush2.bf16.msra.mxu0 0
        %1095 = vmatprep.mubr.bf16.mxu0 0
        %1096 = vmatmul.mubr.bf16.gmra.mxu0 %v1007
        %v1097 = vpop.f32.mrf.mxu0
        %v1098 = vadd.f32 %v953, %v1097
        %v1099 = vpop.f32.mrf.mxu0
        %v1100 = vadd.f32 %v953, %v1099
        %v1101 = vpop.f32.mrf.mxu0
        %v1102 = vpop.f32.mrf.mxu0
        %1103 = vdwg.mxu0
        %v1104 = vmax.f32 %v1057, 0.0
        %v1105 = vmax.f32 %v1059, 0.0
        %v1106 = vmax.f32 %v1098, 0.0
        %v1107 = vmax.f32 %v1100, 0.0
        %v1108 = vpack.c.bf16 %v1104, %v1104
        %v1109 = vpack.c.bf16 %v1105, %v1105
        %v1110 = vpack.c.bf16 %v1106, %v1106
        %v1111 = vpack.c.bf16 %v1107, %v1107
        %v1116 = vunpack.c.l.b16 %v1108
        %v1117 = vunpack.c.l.b16 %v1109
        %v1118 = vunpack.c.l.b16 %v1110
        %v1119 = vunpack.c.l.b16 %v1111
        %v1120 = vpack.c.b16 %v1117, %v1116
        %v1121 = vpack.c.b16 %v1119, %v1118
        %1124 = vst [vmem:[#allocation5] sm:$0x33] %v1120
        %1125 = vst [vmem:[#allocation5 + $0x8] sm:$0x33] %v1121
        %v1126 = vld [vmem:[%s279] sm:$0x77]
        %v1127 = vld [vmem:[%s279 + $0x8] sm:$0x77]
        %v1130 = vrot.slane %v1126, 6
        %v1131 = vrot.slane %v1127, 6
        %v1132 = vrot.slane %v1130, 4
        %v1133 = vrot.slane %v1131, 4
        %1138 = vst [vmem:[#allocation5] sm:$0xcc] %v1130
        %1139 = vst [vmem:[#allocation5 + $0x8] sm:$0xcc] %v1131
        %1140 = vst [vmem:[#allocation5 + $0x10] sm:$0x11] %v1132
        %1141 = vst [vmem:[#allocation5 + $0x18] sm:$0x11] %v1133
        %v1142 = vld [vmem:[%s5] sm:$0xf]
        %v1143 = vld [vmem:[#allocation5] sm:$0xff]
        %v1144 = vld [vmem:[#allocation5 + $0x8] sm:$0xff]
        %v1145 = vld [vmem:[#allocation5 + $0x10] sm:$0x11]
        %v1146 = vld [vmem:[#allocation5 + $0x18] sm:$0x11]
        %v1147 = vld [vmem:[%s6] sm:$0xff]
        %1149 = vset.pattern.permute.xlu0 0
        %1150 = vperm.xlu0 %1149, %v1147
        %v1151 = vpop.permute.xlu0 %1150
        %v1157 = vunpack.c.l.b16 %v1143
        %v1158 = vunpack.c.h.b16 %v1143
        %v1159 = vunpack.c.l.b16 %v1144
        %v1160 = vunpack.c.h.b16 %v1144
        %v1161 = vunpack.c.l.b16 %v1145
        %v1162 = vunpack.c.h.b16 %v1145
        %v1163 = vunpack.c.l.b16 %v1146
        %v1164 = vunpack.c.h.b16 %v1146
        %v1165 = vpack.c.b16 %v1161, %v1157
        %v1166 = vpack.c.b16 %v1162, %v1158
        %v1167 = vpack.c.b16 %v1163, %v1159
        %v1168 = vpack.c.b16 %v1164, %v1160
        %vm1169 = vcmask 80896
        %v1171 = vsel %vm1169, %v1142, 0
        %vm1173 = vcmask 1044480
        %v1175 = vsel %vm1173, %v1165, 0
        %v1178 = vsel %vm1173, %v1166, 0
        %v1181 = vsel %vm1173, %v1167, 0
        %v1184 = vsel %vm1173, %v1168, 0
        %1186 = vmatprep.subr.bf16.mxu0 0
        %1187 = vmatpush1.bf16.msra.mxu0 0
        %1188 = vmatprep.subr.bf16.mxu0 0
        %1189 = vmatpush1.bf16.msra.mxu0 0
        %1190 = vmatprep.subr.bf16.mxu0 0
        %1191 = vmatpush1.bf16.msra.mxu0 0
        %1192 = vmatprep.subr.bf16.mxu0 0
        %1193 = vmatpush1.bf16.msra.mxu0 0
        %1194 = vmatprep.subr.bf16.mxu0 0
        %1195 = vmatpush1.bf16.msra.mxu0 0
        %1196 = vmatprep.subr.bf16.mxu0 0
        %1197 = vmatpush1.bf16.msra.mxu0 0
        %1198 = vmatprep.subr.bf16.mxu0 0
        %1199 = vmatpush1.bf16.msra.mxu0 0
        %1200 = vmatprep.subr.bf16.mxu0 %v1178
        %1201 = vmatpush1.bf16.msra.mxu0 %v1175
        %1202 = vmatprep.subr.bf16.mxu0 0
        %1203 = vmatpush2.bf16.msra.mxu0 0
        %1204 = vmatprep.subr.bf16.mxu0 0
        %1205 = vmatpush2.bf16.msra.mxu0 0
        %1206 = vmatprep.subr.bf16.mxu0 0
        %1207 = vmatpush2.bf16.msra.mxu0 0
        %1208 = vmatprep.subr.bf16.mxu0 0
        %1209 = vmatpush2.bf16.msra.mxu0 0
        %1210 = vmatprep.subr.bf16.mxu0 0
        %1211 = vmatpush2.bf16.msra.mxu0 0
        %1212 = vmatprep.subr.bf16.mxu0 0
        %1213 = vmatpush2.bf16.msra.mxu0 0
        %1214 = vmatprep.subr.bf16.mxu0 0
        %1215 = vmatpush2.bf16.msra.mxu0 0
        %1216 = vmatprep.subr.bf16.mxu0 0
        %1217 = vmatpush2.bf16.msra.mxu0 0
        %1218 = vmatprep.mubr.bf16.mxu0 0
        %1219 = vmatmul.mubr.bf16.gmra.mxu0 %v1171
        %v1220 = vpop.f32.mrf.mxu0
        %v1221 = vadd.f32 %v1151, %v1220
        %v1222 = vpop.f32.mrf.mxu0
        %v1223 = vadd.f32 %v1151, %v1222
        %v1224 = vpop.f32.mrf.mxu0
        %v1225 = vpop.f32.mrf.mxu0
        %1226 = vdwg.mxu0
        %1227 = vmatprep.subr.bf16.mxu0 0
        %1228 = vmatpush1.bf16.msra.mxu0 0
        %1229 = vmatprep.subr.bf16.mxu0 0
        %1230 = vmatpush1.bf16.msra.mxu0 0
        %1231 = vmatprep.subr.bf16.mxu0 0
        %1232 = vmatpush1.bf16.msra.mxu0 0
        %1233 = vmatprep.subr.bf16.mxu0 0
        %1234 = vmatpush1.bf16.msra.mxu0 0
        %1235 = vmatprep.subr.bf16.mxu0 0
        %1236 = vmatpush1.bf16.msra.mxu0 0
        %1237 = vmatprep.subr.bf16.mxu0 0
        %1238 = vmatpush1.bf16.msra.mxu0 0
        %1239 = vmatprep.subr.bf16.mxu0 0
        %1240 = vmatpush1.bf16.msra.mxu0 0
        %1241 = vmatprep.subr.bf16.mxu0 %v1184
        %1242 = vmatpush1.bf16.msra.mxu0 %v1181
        %1243 = vmatprep.subr.bf16.mxu0 0
        %1244 = vmatpush2.bf16.msra.mxu0 0
        %1245 = vmatprep.subr.bf16.mxu0 0
        %1246 = vmatpush2.bf16.msra.mxu0 0
        %1247 = vmatprep.subr.bf16.mxu0 0
        %1248 = vmatpush2.bf16.msra.mxu0 0
        %1249 = vmatprep.subr.bf16.mxu0 0
        %1250 = vmatpush2.bf16.msra.mxu0 0
        %1251 = vmatprep.subr.bf16.mxu0 0
        %1252 = vmatpush2.bf16.msra.mxu0 0
        %1253 = vmatprep.subr.bf16.mxu0 0
        %1254 = vmatpush2.bf16.msra.mxu0 0
        %1255 = vmatprep.subr.bf16.mxu0 0
        %1256 = vmatpush2.bf16.msra.mxu0 0
        %1257 = vmatprep.subr.bf16.mxu0 0
        %1258 = vmatpush2.bf16.msra.mxu0 0
        %1259 = vmatprep.mubr.bf16.mxu0 0
        %1260 = vmatmul.mubr.bf16.gmra.mxu0 %v1171
        %v1261 = vpop.f32.mrf.mxu0
        %v1262 = vadd.f32 %v1151, %v1261
        %v1263 = vpop.f32.mrf.mxu0
        %v1264 = vadd.f32 %v1151, %v1263
        %v1265 = vpop.f32.mrf.mxu0
        %v1266 = vpop.f32.mrf.mxu0
        %1267 = vdwg.mxu0
        %v1268 = vmax.f32 %v1221, 0.0
        %v1269 = vmax.f32 %v1223, 0.0
        %v1270 = vmax.f32 %v1262, 0.0
        %v1271 = vmax.f32 %v1264, 0.0
        %v1272 = vpack.c.bf16 %v1268, %v1268
        %v1273 = vpack.c.bf16 %v1269, %v1269
        %v1274 = vpack.c.bf16 %v1270, %v1270
        %v1275 = vpack.c.bf16 %v1271, %v1271
        %v1280 = vunpack.c.l.b16 %v1272
        %v1281 = vunpack.c.l.b16 %v1273
        %v1282 = vunpack.c.l.b16 %v1274
        %v1283 = vunpack.c.l.b16 %v1275
        %v1284 = vpack.c.b16 %v1281, %v1280
        %v1285 = vpack.c.b16 %v1283, %v1282
        %1288 = vst [vmem:[%s270] sm:$0xff] %v1284
        %1289 = vst [vmem:[%s270 + $0x8] sm:$0xff] %v1285
        %s1290 = sand.u32 %s176, 1
        %s1291 = scalar_lea.sflag [#allocation7], %s1290
        %s1292 = sand.u32 %s176, 1
        %s1293 = smul.addr %s1292, 16
        %s1294 = scalar_lea.vmem [#allocation6], %s1293
        // Predicated region
        $region127: #{tpu_custom_call.1} parent=43 // pred_check
          %p1295 = pneg %p186
        $region128: #{tpu_custom_call.1} parent=43 // pred_check_branch
          %1297 = sbr.rel (%p1295) target = $region130
        $region129: #{tpu_custom_call.1} parent=43 // pred_region
          %s1298 = smul.u32 4, %s26
          %s1300 = ssub.s32 256, 256
          %1301 = vsyncadd %s1291, %s1300
          %s1302 = smul.addr %s25, 8
          %s1303 = sadd.s32 %s1298, %s1302
          %s1304 = smul.addr %s1303, 64
          %s1305 = scalar_lea.hbm %s7, %s1304
          %s1307 = sshll.u32 %s1294, 4
          %s1308 = int_to_ptr.vmem [resolvable:$true] %s1307
          %1310 = dma.vmem_to_hbm [thread:$0]  %s1308, 256, %s1305, %s1291
        $region130: #{tpu_custom_call.1} parent=43 // pred_fallthru
          _
      $region44: #{tpu_custom_call.1} parent=5 // pred_fallthru
        _
      %p1311 = scmp.le.s32.totalorder 2, %s16
      // Predicated region
      $region131: #{tpu_custom_call.1} parent=5 // pred_check
        %p1312 = pneg %p1311
      $region132: #{tpu_custom_call.1} parent=5 // pred_check_branch
        %1314 = sbr.rel (%p1312) target = $region134
      $region133: #{tpu_custom_call.1} parent=5 // pred_region
        %s1315 = ssub.s32 %s16, 2
        // Predicated region
        $region135: #{tpu_custom_call.1} parent=133 // pred_check
          %p1316 = pneg %p192
        $region136: #{tpu_custom_call.1} parent=133 // pred_check_branch
          %1318 = sbr.rel (%p1316) target = $region138
        $region137: #{tpu_custom_call.1} parent=133 // pred_region
          %s1319 = sand.u32 %s177, 1
          %s1320 = scalar_lea.sflag [#allocation7], %s1319
          %s1321 = sand.u32 %s177, 1
          %s1322 = smul.addr %s1321, 16
          %s1323 = scalar_lea.vmem [#allocation6], %s1322
          %1324 = dma.done %s1320, 256
        $region138: #{tpu_custom_call.1} parent=133 // pred_fallthru
          _
      $region134: #{tpu_custom_call.1} parent=5 // pred_fallthru
        _
    $region6: #{tpu_custom_call.1} parent=1 // loop_footer
      %s20 = sadd.s32 1, %s16
    $region7: #{tpu_custom_call.1} parent=1 // loop_footer_branch
      %15 = sbr.rel target = $region3
    $region8: #{tpu_custom_call.1} parent=1 // loop_exit
      _
    %1325 = vsyncpa [#allocation7], 1
    %s1326 = scalar_lea.sflag [#allocation7], 1
    %1327 = vsyncpa %s1326, 1
  %1328 = vsyncmov [#allocation3]
  %s1329 = vpop.sfrf %1328
  %p1330 = scmp.eq.s32.totalorder %s1329, 0
  %p1331 = pneg %p1330
  %1333 = shalt.err (%p1331)
  %s1334 = scalar_lea.sflag [#allocation3], 1
  %1335 = vsyncmov %s1334
  %s1336 = vpop.sfrf %1335
  %p1337 = scmp.eq.s32.totalorder %s1336, 0
  %p1338 = pneg %p1337
  %1340 = shalt.err (%p1338)

</llo_original>
